<compile_context>
chip_gen: v6e
topology: v6e:2x2x1
jax: 0.10.0
libtpu: 0.0.40
codegen_flags: <defaults>
</compile_context>

<pallas_src>
import functools
import math

import jax
import jax.numpy as jnp
from jax.experimental import pallas as pl
from jax.experimental.pallas import tpu as pltpu

_EPS = 1e-5                                   # nn.LayerNorm default eps
_SQRT_2_OVER_PI = math.sqrt(2.0 / math.pi)

_PARAM_ORDER = ("w_down", "b_down", "wl", "bl", "w1", "b1", "w2", "b2",
                "ln_g", "ln_b", "w_up", "b_up")


def _gelu_tanh(x):
    # tanh-approx GELU: keeps the transcendental on the EUP slot (an exact erf expands to
    # a long f32 VPU polynomial, the binding unit on v6e/v7x).  ~1e-3 deviation from
    # torch.nn.GELU()'s default erf form.
    return 0.5 * x * (1.0 + jnp.tanh(_SQRT_2_OVER_PI * (x + 0.044715 * x * x * x)))


# ---------------------------------------------------------------------------
# Fused kernel: adapter_down -> linear_{x|z} -> gating -> Mlp -> LayerNorm ->
# residual -> adapter_up, all on one (B, TT, E) token tile.
# ---------------------------------------------------------------------------
def _ms_fusion_kernel(x_ref, xi_ref,
                      wd_ref, bd_ref,
                      wl_ref, bl_ref,
                      w1_ref, b1_ref, w2_ref, b2_ref,
                      g_ref, beta_ref,
                      wu_ref, bu_ref,
                      o_ref, *, lens_z):
    tb, tt, _ = x_ref.shape
    rows = tb * tt
    # Branch of this token tile: 0 = z/template (linear_z, mlp2), 1 = x/search
    # (linear_x, mlp1).  Tiles never straddle the boundary (tt | gcd(lens_z, Nx)).
    branch = (pl.program_id(0) * tt >= lens_z).astype(jnp.int32)

    xb = x_ref[...].reshape(rows, -1)          # bf16 (rows, E)
    xib = xi_ref[...].reshape(rows, -1)

    # adapter_down on both modality streams (shared weights), f32 accumulation.
    wd = wd_ref[...]
    bd = bd_ref[...]
    xv = jnp.dot(xb, wd, preferred_element_type=jnp.float32) + bd
    xiv = jnp.dot(xib, wd, preferred_element_type=jnp.float32) + bd

    # linear_x|z over channel-concat([x_v, x_i]).  wl holds [W_v ; W_i] pre-concatenated
    # along K and pre-scaled by 2 (gating fold) -> one K=2*dim matmul, full MXU K tiles.
    cat = jnp.concatenate(
        [xv.astype(jnp.bfloat16), xiv.astype(jnp.bfloat16)], axis=-1)
    xl2 = (jnp.dot(cat, wl_ref[branch], preferred_element_type=jnp.float32)
           + bl_ref[branch])

    # TODO(synk): ShuffleAttention (block1_*) and LSA (block2_*) class definitions are not
    # provided in the source; substituted with identity, so x1 + x2 == 2*xl and the gating
    # (x1+x2)*x_v + (x1+x2)*x_i collapses to 2*xl*(x_v + x_i); the 2 is folded into wl/bl.
    xo = xl2 * (xv + xiv)

    # Mlp: fc1 -> GELU -> fc2 (Dropout p=0.0 -> identity).
    h = (jnp.dot(xo.astype(jnp.bfloat16), w1_ref[branch],
                 preferred_element_type=jnp.float32) + b1_ref[branch])
    h = _gelu_tanh(h)
    m = (jnp.dot(h.astype(jnp.bfloat16), w2_ref[branch],
                 preferred_element_type=jnp.float32) + b2_ref[branch])

    # LayerNorm over channels (biased variance, eps=1e-5), f32.
    mu = jnp.mean(m, axis=-1, keepdims=True)
    var = jnp.mean(jnp.square(m - mu), axis=-1, keepdims=True)
    ln = (m - mu) * jax.lax.rsqrt(var + _EPS) * g_ref[...] + beta_ref[...]

    row = xo + ln                               # residual

    # Dropout(0.1) -> identity (eval mode), then adapter_up; bf16 store.
    out = (jnp.dot(row.astype(jnp.bfloat16), wu_ref[...],
                   preferred_element_type=jnp.float32) + bu_ref[...])
    o_ref[...] = out.astype(o_ref.dtype).reshape(o_ref.shape)


# ---------------------------------------------------------------------------
# Wrapper
# ---------------------------------------------------------------------------
def _pick_token_tile(lens_z, n_x, batch, rows_max):
    """Largest token tile that (a) is a multiple of 8, (b) divides both lens_z and Nx
    (so tiles never cross the template/search boundary), and (c) keeps batch*tt within
    rows_max (falls back to the smallest valid tile)."""
    g = math.gcd(lens_z, n_x)
    cands = [t for t in range(8, g + 1, 8) if g % t == 0]
    if not cands:
        raise ValueError(
            f"lens_z={lens_z}, Nx={n_x}: need a common divisor that is a multiple of 8")
    fitting = [t for t in cands if batch * t <= rows_max]
    return max(fitting) if fitting else min(cands)


def ms_fusion_forward(x, xi, lens_z, params, *, rows_max=512):
    """x, xi: (B, N, E); the first lens_z tokens per batch are template (z) tokens.
    Returns the adapter_up output, (B, N, E) bf16, token order unchanged ([z|x])."""
    B, N, E = x.shape
    n_x = N - lens_z
    tt = _pick_token_tile(lens_z, n_x, B, rows_max)

    # bf16 activations in HBM (upstream layers would normally already provide bf16).
    if x.dtype != jnp.bfloat16:
        x = x.astype(jnp.bfloat16)
    if xi.dtype != jnp.bfloat16:
        xi = xi.astype(jnp.bfloat16)

    weights = tuple(params[k] for k in _PARAM_ORDER)
    e_out = params["w_up"].shape[1]

    act_spec = pl.BlockSpec((B, tt, E), lambda t: (0, t, 0))
    # Whole-array weight blocks with a constant index_map stay resident in VMEM and are
    # never re-fetched -> single-buffer them.
    w_specs = [
        pl.BlockSpec(w.shape, (lambda t, nd=w.ndim: (0,) * nd),
                     pipeline_mode=pl.Buffered(1))
        for w in weights
    ]

    kernel = functools.partial(_ms_fusion_kernel, lens_z=lens_z)
    return pl.pallas_call(
        kernel,
        out_shape=jax.ShapeDtypeStruct((B, N, e_out), jnp.bfloat16),
        grid=(N // tt,),
        in_specs=[act_spec, act_spec] + w_specs,
        out_specs=pl.BlockSpec((B, tt, e_out), lambda t: (0, t, 0)),
        compiler_params=pltpu.CompilerParams(
            dimension_semantics=("parallel",),       # shard token tiles across TCs (v7x)
            vmem_limit_bytes=32 * 1024 * 1024),      # lift v5e's 16 MiB default scoped limit
    )(x, xi, *weights)


# ---------------------------------------------------------------------------
# Parameters: synthetic init in the PyTorch module's layout + one-time host-side
# packing for the fused kernel.
# NOTE: the original __init__ zero-inits adapter_down/adapter_up, which would make the
# whole forward identically zero; small random deterministic values are used instead so
# the kernel computes something non-trivial.  Matmul weights bf16, biases/LN params f32.
# ---------------------------------------------------------------------------
def init_params(key, embed, dim):
    hidden = dim * 2
    ks = jax.random.split(key, 18)

    def w(k, shape, scale=0.05):
        return (scale * jax.random.normal(k, shape)).astype(jnp.bfloat16)

    def b(k, n, scale=0.05):
        return (scale * jax.random.normal(k, (1, n))).astype(jnp.float32)

    return dict(
        # adapter_down: Linear(embed, dim); adapter_up: Linear(dim, embed)
        w_down=w(ks[0], (embed, dim)), b_down=b(ks[1], dim),
        w_up=w(ks[2], (dim, embed)), b_up=b(ks[3], embed),
        # linear_x / linear_z: Linear(2*dim, dim) split into v-half and i-half
        wlx_v=w(ks[4], (dim, dim)), wlx_i=w(ks[5], (dim, dim)), blx=b(ks[6], dim),
        wlz_v=w(ks[7], (dim, dim)), wlz_i=w(ks[8], (dim, dim)), blz=b(ks[9], dim),
        # mlp1 / mlp2: Linear(dim, 2*dim) -> GELU -> Linear(2*dim, dim)
        m1_w1=w(ks[10], (dim, hidden)), m1_b1=b(ks[11], hidden),
        m1_w2=w(ks[12], (hidden, dim)), m1_b2=b(ks[13], dim),
        m2_w1=w(ks[14], (dim, hidden)), m2_b1=b(ks[15], hidden),
        m2_w2=w(ks[16], (hidden, dim)), m2_b2=b(ks[17], dim),
        # shared LayerNorm(dim)
        ln_g=jnp.ones((1, dim), jnp.float32), ln_b=jnp.zeros((1, dim), jnp.float32),
    )


def pack_params(p):
    """One-time packing for the fused kernel:
       * per-branch weights stacked on a leading axis (index 0 = z branch, 1 = x branch)
       * linear_x/z v/i weight halves concatenated along K
       * gating factor 2 ((x1+x2) == 2*xl under the identity TODO) folded into wl/bl."""
    two = jnp.float32(2.0)
    wl = jnp.stack([
        jnp.concatenate([p["wlz_v"], p["wlz_i"]], axis=0),
        jnp.concatenate([p["wlx_v"], p["wlx_i"]], axis=0),
    ]) * two
    bl = jnp.stack([p["blz"], p["blx"]]) * two
    return dict(
        w_down=p["w_down"], b_down=p["b_down"],
        wl=wl.astype(jnp.bfloat16), bl=bl.astype(jnp.float32),
        w1=jnp.stack([p["m2_w1"], p["m1_w1"]]), b1=jnp.stack([p["m2_b1"], p["m1_b1"]]),
        w2=jnp.stack([p["m2_w2"], p["m1_w2"]]), b2=jnp.stack([p["m2_b2"], p["m1_b2"]]),
        ln_g=p["ln_g"], ln_b=p["ln_b"],
        w_up=p["w_up"], b_up=p["b_up"],
    )


if __name__ == "__main__":
    # Small shapes consistent with the module (real: embed=768, dim=384,
    # lens_z=64 = 8x8 template patch, Nx=256 = 16x16 search patch).
    B = 2
    lens_z = 16          # 4x4 template patch
    n_x = 64             # 8x8 search patch
    N = lens_z + n_x
    embed = 64           # stand-in for 768
    dim = embed // 2     # stand-in for 384

    key = jax.random.PRNGKey(0)
    kx, kxi, kp = jax.random.split(key, 3)
    x = jax.random.normal(kx, (B, N, embed), jnp.float32)
    xi = jax.random.normal(kxi, (B, N, embed), jnp.float32)
    params = pack_params(init_params(kp, embed, dim))

    fwd = jax.jit(lambda a, b, p: ms_fusion_forward(a, b, lens_z, p))
    out = fwd(x, xi, params)
    jax.block_until_ready(out)

    assert out.shape == (B, N, embed), out.shape
    assert bool(jnp.all(jnp.isfinite(out.astype(jnp.float32))))
    print("KERNEL_OK")
</pallas_src>

<mosaic_0001>
module attributes {stable_mosaic.version = 11 : i64} {
  func.func @_ms_fusion_kernel(%arg0: i32, %arg1: memref<2x16x64xbf16, #tpu.memory_space<vmem>>, %arg2: memref<2x16x64xbf16, #tpu.memory_space<vmem>>, %arg3: memref<64x32xbf16, #tpu.memory_space<vmem>>, %arg4: memref<1x32xf32, #tpu.memory_space<vmem>>, %arg5: memref<2x64x32xbf16, #tpu.memory_space<vmem>>, %arg6: memref<2x1x32xf32, #tpu.memory_space<vmem>>, %arg7: memref<2x32x64xbf16, #tpu.memory_space<vmem>>, %arg8: memref<2x1x64xf32, #tpu.memory_space<vmem>>, %arg9: memref<2x64x32xbf16, #tpu.memory_space<vmem>>, %arg10: memref<2x1x32xf32, #tpu.memory_space<vmem>>, %arg11: memref<1x32xf32, #tpu.memory_space<vmem>>, %arg12: memref<1x32xf32, #tpu.memory_space<vmem>>, %arg13: memref<32x64xbf16, #tpu.memory_space<vmem>>, %arg14: memref<1x64xf32, #tpu.memory_space<vmem>>, %arg15: memref<2x16x64xbf16, #tpu.memory_space<vmem>>) attributes {dimension_semantics = [#tpu.dimension_semantics<parallel>], iteration_bounds = array<i64: 5>, scalar_prefetch = 0 : i64, scratch_operands = 0 : i64, tpu.core_type = #tpu.core_type<tc>, window_params = [{transform_indices = @transform_0, window_bounds = array<i64: 2, 16, 64>}, {transform_indices = @transform_1, window_bounds = array<i64: 2, 16, 64>}, {pipeline_mode = #tpu.pipeline_mode<synchronous>, transform_indices = @transform_2, window_bounds = array<i64: 64, 32>}, {pipeline_mode = #tpu.pipeline_mode<synchronous>, transform_indices = @transform_3, window_bounds = array<i64: 1, 32>}, {pipeline_mode = #tpu.pipeline_mode<synchronous>, transform_indices = @transform_4, window_bounds = array<i64: 2, 64, 32>}, {pipeline_mode = #tpu.pipeline_mode<synchronous>, transform_indices = @transform_5, window_bounds = array<i64: 2, 1, 32>}, {pipeline_mode = #tpu.pipeline_mode<synchronous>, transform_indices = @transform_6, window_bounds = array<i64: 2, 32, 64>}, {pipeline_mode = #tpu.pipeline_mode<synchronous>, transform_indices = @transform_7, window_bounds = array<i64: 2, 1, 64>}, {pipeline_mode = #tpu.pipeline_mode<synchronous>, transform_indices = @transform_8, window_bounds = array<i64: 2, 64, 32>}, {pipeline_mode = #tpu.pipeline_mode<synchronous>, transform_indices = @transform_9, window_bounds = array<i64: 2, 1, 32>}, {pipeline_mode = #tpu.pipeline_mode<synchronous>, transform_indices = @transform_10, window_bounds = array<i64: 1, 32>}, {pipeline_mode = #tpu.pipeline_mode<synchronous>, transform_indices = @transform_11, window_bounds = array<i64: 1, 32>}, {pipeline_mode = #tpu.pipeline_mode<synchronous>, transform_indices = @transform_12, window_bounds = array<i64: 32, 64>}, {pipeline_mode = #tpu.pipeline_mode<synchronous>, transform_indices = @transform_13, window_bounds = array<i64: 1, 64>}, {transform_indices = @transform_14, window_bounds = array<i64: 2, 16, 64>}]} {
    %c16_i32 = arith.constant 16 : i32
    %0 = arith.muli %arg0, %c16_i32 : i32
    %c16_i32_0 = arith.constant 16 : i32
    %1 = arith.cmpi sge, %0, %c16_i32_0 : i32
    %2 = arith.extui %1 : i1 to i32
    %c0 = arith.constant 0 : index
    %c0_1 = arith.constant 0 : index
    %c0_2 = arith.constant 0 : index
    %3 = vector.load %arg1[%c0, %c0_1, %c0_2] : memref<2x16x64xbf16, #tpu.memory_space<vmem>>, vector<2x16x64xbf16>
    %4 = vector.shape_cast %3 : vector<2x16x64xbf16> to vector<32x64xbf16>
    %c0_3 = arith.constant 0 : index
    %c0_4 = arith.constant 0 : index
    %c0_5 = arith.constant 0 : index
    %5 = vector.load %arg2[%c0_3, %c0_4, %c0_5] : memref<2x16x64xbf16, #tpu.memory_space<vmem>>, vector<2x16x64xbf16>
    %6 = vector.shape_cast %5 : vector<2x16x64xbf16> to vector<32x64xbf16>
    %c0_6 = arith.constant 0 : index
    %c0_7 = arith.constant 0 : index
    %7 = vector.load %arg3[%c0_6, %c0_7] : memref<64x32xbf16, #tpu.memory_space<vmem>>, vector<64x32xbf16>
    %c0_8 = arith.constant 0 : index
    %c0_9 = arith.constant 0 : index
    %8 = vector.load %arg4[%c0_8, %c0_9] : memref<1x32xf32, #tpu.memory_space<vmem>>, vector<1x32xf32>
    %cst = arith.constant dense<0.000000e+00> : vector<32x32xf32>
    %9 = tpu.matmul %4, %7, %cst {dimension_numbers = #tpu.dot_dimension_numbers<[1], [0], [0], [1], [0, 0, 1, 1], [], []>} : vector<32x64xbf16>, vector<64x32xbf16>, vector<32x32xf32> -> vector<32x32xf32>
    %10 = vector.broadcast %8 : vector<1x32xf32> to vector<32x32xf32>
    %11 = arith.addf %9, %10 : vector<32x32xf32>
    %cst_10 = arith.constant dense<0.000000e+00> : vector<32x32xf32>
    %12 = tpu.matmul %6, %7, %cst_10 {dimension_numbers = #tpu.dot_dimension_numbers<[1], [0], [0], [1], [0, 0, 1, 1], [], []>} : vector<32x64xbf16>, vector<64x32xbf16>, vector<32x32xf32> -> vector<32x32xf32>
    %13 = vector.broadcast %8 : vector<1x32xf32> to vector<32x32xf32>
    %14 = arith.addf %12, %13 : vector<32x32xf32>
    %15 = arith.truncf %11 : vector<32x32xf32> to vector<32x32xbf16>
    %16 = arith.truncf %14 : vector<32x32xf32> to vector<32x32xbf16>
    %17 = tpu.concatenate %15, %16 in 1 : vector<32x32xbf16>, vector<32x32xbf16> -> vector<32x64xbf16>
    %18 = arith.index_cast %2 : i32 to index
    %c0_11 = arith.constant 0 : index
    %c0_12 = arith.constant 0 : index
    %19 = vector.load %arg5[%18, %c0_11, %c0_12] : memref<2x64x32xbf16, #tpu.memory_space<vmem>>, vector<1x64x32xbf16>
    %20 = vector.shape_cast %19 : vector<1x64x32xbf16> to vector<64x32xbf16>
    %cst_13 = arith.constant dense<0.000000e+00> : vector<32x32xf32>
    %21 = tpu.matmul %17, %20, %cst_13 {dimension_numbers = #tpu.dot_dimension_numbers<[1], [0], [0], [1], [0, 0, 1, 1], [], []>} : vector<32x64xbf16>, vector<64x32xbf16>, vector<32x32xf32> -> vector<32x32xf32>
    %22 = arith.index_cast %2 : i32 to index
    %c0_14 = arith.constant 0 : index
    %c0_15 = arith.constant 0 : index
    %23 = vector.load %arg6[%22, %c0_14, %c0_15] : memref<2x1x32xf32, #tpu.memory_space<vmem>>, vector<1x1x32xf32>
    %24 = vector.shape_cast %23 : vector<1x1x32xf32> to vector<1x32xf32>
    %25 = vector.broadcast %24 : vector<1x32xf32> to vector<32x32xf32>
    %26 = arith.addf %21, %25 : vector<32x32xf32>
    %27 = arith.addf %11, %14 : vector<32x32xf32>
    %28 = arith.mulf %26, %27 : vector<32x32xf32>
    %29 = arith.truncf %28 : vector<32x32xf32> to vector<32x32xbf16>
    %30 = arith.index_cast %2 : i32 to index
    %c0_16 = arith.constant 0 : index
    %c0_17 = arith.constant 0 : index
    %31 = vector.load %arg7[%30, %c0_16, %c0_17] : memref<2x32x64xbf16, #tpu.memory_space<vmem>>, vector<1x32x64xbf16>
    %32 = vector.shape_cast %31 : vector<1x32x64xbf16> to vector<32x64xbf16>
    %cst_18 = arith.constant dense<0.000000e+00> : vector<32x64xf32>
    %33 = tpu.matmul %29, %32, %cst_18 {dimension_numbers = #tpu.dot_dimension_numbers<[1], [0], [0], [1], [0, 0, 1, 1], [], []>} : vector<32x32xbf16>, vector<32x64xbf16>, vector<32x64xf32> -> vector<32x64xf32>
    %34 = arith.index_cast %2 : i32 to index
    %c0_19 = arith.constant 0 : index
    %c0_20 = arith.constant 0 : index
    %35 = vector.load %arg8[%34, %c0_19, %c0_20] : memref<2x1x64xf32, #tpu.memory_space<vmem>>, vector<1x1x64xf32>
    %36 = vector.shape_cast %35 : vector<1x1x64xf32> to vector<1x64xf32>
    %37 = vector.broadcast %36 : vector<1x64xf32> to vector<32x64xf32>
    %38 = arith.addf %33, %37 : vector<32x64xf32>
    %cst_21 = arith.constant 5.000000e-01 : f32
    %39 = vector.broadcast %cst_21 : f32 to vector<32x64xf32>
    %40 = arith.mulf %39, %38 : vector<32x64xf32>
    %cst_22 = arith.constant 4.471500e-02 : f32
    %41 = vector.broadcast %cst_22 : f32 to vector<32x64xf32>
    %42 = arith.mulf %41, %38 : vector<32x64xf32>
    %43 = arith.mulf %42, %38 : vector<32x64xf32>
    %44 = arith.mulf %43, %38 : vector<32x64xf32>
    %45 = arith.addf %38, %44 : vector<32x64xf32>
    %cst_23 = arith.constant 0.797884583 : f32
    %46 = vector.broadcast %cst_23 : f32 to vector<32x64xf32>
    %47 = arith.mulf %46, %45 : vector<32x64xf32>
    %48 = math.tanh %47 : vector<32x64xf32>
    %cst_24 = arith.constant 1.000000e+00 : f32
    %49 = vector.broadcast %cst_24 : f32 to vector<32x64xf32>
    %50 = arith.addf %49, %48 : vector<32x64xf32>
    %51 = arith.mulf %40, %50 : vector<32x64xf32>
    %52 = arith.truncf %51 : vector<32x64xf32> to vector<32x64xbf16>
    %53 = arith.index_cast %2 : i32 to index
    %c0_25 = arith.constant 0 : index
    %c0_26 = arith.constant 0 : index
    %54 = vector.load %arg9[%53, %c0_25, %c0_26] : memref<2x64x32xbf16, #tpu.memory_space<vmem>>, vector<1x64x32xbf16>
    %55 = vector.shape_cast %54 : vector<1x64x32xbf16> to vector<64x32xbf16>
    %cst_27 = arith.constant dense<0.000000e+00> : vector<32x32xf32>
    %56 = tpu.matmul %52, %55, %cst_27 {dimension_numbers = #tpu.dot_dimension_numbers<[1], [0], [0], [1], [0, 0, 1, 1], [], []>} : vector<32x64xbf16>, vector<64x32xbf16>, vector<32x32xf32> -> vector<32x32xf32>
    %57 = arith.index_cast %2 : i32 to index
    %c0_28 = arith.constant 0 : index
    %c0_29 = arith.constant 0 : index
    %58 = vector.load %arg10[%57, %c0_28, %c0_29] : memref<2x1x32xf32, #tpu.memory_space<vmem>>, vector<1x1x32xf32>
    %59 = vector.shape_cast %58 : vector<1x1x32xf32> to vector<1x32xf32>
    %60 = vector.broadcast %59 : vector<1x32xf32> to vector<32x32xf32>
    %61 = arith.addf %56, %60 : vector<32x32xf32>
    %cst_30 = arith.constant dense<0.000000e+00> : vector<32xf32>
    %62 = vector.multi_reduction <add>, %61, %cst_30 [1] : vector<32x32xf32> to vector<32xf32>
    %63 = vector.shape_cast %62 : vector<32xf32> to vector<32x1xf32>
    %cst_31 = arith.constant 3.200000e+01 : f32
    %64 = vector.broadcast %cst_31 : f32 to vector<32x1xf32>
    %65 = arith.divf %63, %64 : vector<32x1xf32>
    %66 = vector.broadcast %65 : vector<32x1xf32> to vector<32x32xf32>
    %67 = arith.subf %61, %66 : vector<32x32xf32>
    %68 = arith.mulf %67, %67 : vector<32x32xf32>
    %cst_32 = arith.constant dense<0.000000e+00> : vector<32xf32>
    %69 = vector.multi_reduction <add>, %68, %cst_32 [1] : vector<32x32xf32> to vector<32xf32>
    %70 = vector.shape_cast %69 : vector<32xf32> to vector<32x1xf32>
    %cst_33 = arith.constant 3.200000e+01 : f32
    %71 = vector.broadcast %cst_33 : f32 to vector<32x1xf32>
    %72 = arith.divf %70, %71 : vector<32x1xf32>
    %73 = vector.broadcast %65 : vector<32x1xf32> to vector<32x32xf32>
    %74 = arith.subf %61, %73 : vector<32x32xf32>
    %cst_34 = arith.constant 9.99999974E-6 : f32
    %75 = vector.broadcast %cst_34 : f32 to vector<32x1xf32>
    %76 = arith.addf %72, %75 : vector<32x1xf32>
    %77 = math.rsqrt %76 : vector<32x1xf32>
    %78 = vector.broadcast %77 : vector<32x1xf32> to vector<32x32xf32>
    %79 = arith.mulf %74, %78 : vector<32x32xf32>
    %c0_35 = arith.constant 0 : index
    %c0_36 = arith.constant 0 : index
    %80 = vector.load %arg11[%c0_35, %c0_36] : memref<1x32xf32, #tpu.memory_space<vmem>>, vector<1x32xf32>
    %81 = vector.broadcast %80 : vector<1x32xf32> to vector<32x32xf32>
    %82 = arith.mulf %79, %81 : vector<32x32xf32>
    %c0_37 = arith.constant 0 : index
    %c0_38 = arith.constant 0 : index
    %83 = vector.load %arg12[%c0_37, %c0_38] : memref<1x32xf32, #tpu.memory_space<vmem>>, vector<1x32xf32>
    %84 = vector.broadcast %83 : vector<1x32xf32> to vector<32x32xf32>
    %85 = arith.addf %82, %84 : vector<32x32xf32>
    %86 = arith.addf %28, %85 : vector<32x32xf32>
    %87 = arith.truncf %86 : vector<32x32xf32> to vector<32x32xbf16>
    %c0_39 = arith.constant 0 : index
    %c0_40 = arith.constant 0 : index
    %88 = vector.load %arg13[%c0_39, %c0_40] : memref<32x64xbf16, #tpu.memory_space<vmem>>, vector<32x64xbf16>
    %cst_41 = arith.constant dense<0.000000e+00> : vector<32x64xf32>
    %89 = tpu.matmul %87, %88, %cst_41 {dimension_numbers = #tpu.dot_dimension_numbers<[1], [0], [0], [1], [0, 0, 1, 1], [], []>} : vector<32x32xbf16>, vector<32x64xbf16>, vector<32x64xf32> -> vector<32x64xf32>
    %c0_42 = arith.constant 0 : index
    %c0_43 = arith.constant 0 : index
    %90 = vector.load %arg14[%c0_42, %c0_43] : memref<1x64xf32, #tpu.memory_space<vmem>>, vector<1x64xf32>
    %91 = vector.broadcast %90 : vector<1x64xf32> to vector<32x64xf32>
    %92 = arith.addf %89, %91 : vector<32x64xf32>
    %93 = arith.truncf %92 : vector<32x64xf32> to vector<32x64xbf16>
    %94 = vector.shape_cast %93 : vector<32x64xbf16> to vector<2x16x64xbf16>
    %c0_44 = arith.constant 0 : index
    %c0_45 = arith.constant 0 : index
    %c0_46 = arith.constant 0 : index
    %95 = vector.load %arg15[%c0_44, %c0_45, %c0_46] : memref<2x16x64xbf16, #tpu.memory_space<vmem>>, vector<2x16x64xbf16>
    tpu.vector_store %arg15[%c0_44, %c0_45, %c0_46], %94 {strides = array<i32>} : memref<2x16x64xbf16, #tpu.memory_space<vmem>>, vector<2x16x64xbf16>,
    return
  }
  func.func @transform_0(%arg0: i32) -> (i32, i32, i32) {
    %c0_i32 = arith.constant 0 : i32
    %c0_i32_0 = arith.constant 0 : i32
    %c0_i32_1 = arith.constant 0 : i32
    return %c0_i32, %arg0, %c0_i32_0 : i32, i32, i32
  }
  func.func @transform_1(%arg0: i32) -> (i32, i32, i32) {
    %c0_i32 = arith.constant 0 : i32
    %c0_i32_0 = arith.constant 0 : i32
    %c0_i32_1 = arith.constant 0 : i32
    return %c0_i32, %arg0, %c0_i32_0 : i32, i32, i32
  }
  func.func @transform_2(%arg0: i32) -> (i32, i32) {
    %c0_i32 = arith.constant 0 : i32
    %c0_i32_0 = arith.constant 0 : i32
    %c0_i32_1 = arith.constant 0 : i32
    return %c0_i32, %c0_i32_0 : i32, i32
  }
  func.func @transform_3(%arg0: i32) -> (i32, i32) {
    %c0_i32 = arith.constant 0 : i32
    %c0_i32_0 = arith.constant 0 : i32
    %c0_i32_1 = arith.constant 0 : i32
    return %c0_i32, %c0_i32_0 : i32, i32
  }
  func.func @transform_4(%arg0: i32) -> (i32, i32, i32) {
    %c0_i32 = arith.constant 0 : i32
    %c0_i32_0 = arith.constant 0 : i32
    %c0_i32_1 = arith.constant 0 : i32
    %c0_i32_2 = arith.constant 0 : i32
    return %c0_i32, %c0_i32_0, %c0_i32_1 : i32, i32, i32
  }
  func.func @transform_5(%arg0: i32) -> (i32, i32, i32) {
    %c0_i32 = arith.constant 0 : i32
    %c0_i32_0 = arith.constant 0 : i32
    %c0_i32_1 = arith.constant 0 : i32
    %c0_i32_2 = arith.constant 0 : i32
    return %c0_i32, %c0_i32_0, %c0_i32_1 : i32, i32, i32
  }
  func.func @transform_6(%arg0: i32) -> (i32, i32, i32) {
    %c0_i32 = arith.constant 0 : i32
    %c0_i32_0 = arith.constant 0 : i32
    %c0_i32_1 = arith.constant 0 : i32
    %c0_i32_2 = arith.constant 0 : i32
    return %c0_i32, %c0_i32_0, %c0_i32_1 : i32, i32, i32
  }
  func.func @transform_7(%arg0: i32) -> (i32, i32, i32) {
    %c0_i32 = arith.constant 0 : i32
    %c0_i32_0 = arith.constant 0 : i32
    %c0_i32_1 = arith.constant 0 : i32
    %c0_i32_2 = arith.constant 0 : i32
    return %c0_i32, %c0_i32_0, %c0_i32_1 : i32, i32, i32
  }
  func.func @transform_8(%arg0: i32) -> (i32, i32, i32) {
    %c0_i32 = arith.constant 0 : i32
    %c0_i32_0 = arith.constant 0 : i32
    %c0_i32_1 = arith.constant 0 : i32
    %c0_i32_2 = arith.constant 0 : i32
    return %c0_i32, %c0_i32_0, %c0_i32_1 : i32, i32, i32
  }
  func.func @transform_9(%arg0: i32) -> (i32, i32, i32) {
    %c0_i32 = arith.constant 0 : i32
    %c0_i32_0 = arith.constant 0 : i32
    %c0_i32_1 = arith.constant 0 : i32
    %c0_i32_2 = arith.constant 0 : i32
    return %c0_i32, %c0_i32_0, %c0_i32_1 : i32, i32, i32
  }
  func.func @transform_10(%arg0: i32) -> (i32, i32) {
    %c0_i32 = arith.constant 0 : i32
    %c0_i32_0 = arith.constant 0 : i32
    %c0_i32_1 = arith.constant 0 : i32
    return %c0_i32, %c0_i32_0 : i32, i32
  }
  func.func @transform_11(%arg0: i32) -> (i32, i32) {
    %c0_i32 = arith.constant 0 : i32
    %c0_i32_0 = arith.constant 0 : i32
    %c0_i32_1 = arith.constant 0 : i32
    return %c0_i32, %c0_i32_0 : i32, i32
  }
  func.func @transform_12(%arg0: i32) -> (i32, i32) {
    %c0_i32 = arith.constant 0 : i32
    %c0_i32_0 = arith.constant 0 : i32
    %c0_i32_1 = arith.constant 0 : i32
    return %c0_i32, %c0_i32_0 : i32, i32
  }
  func.func @transform_13(%arg0: i32) -> (i32, i32) {
    %c0_i32 = arith.constant 0 : i32
    %c0_i32_0 = arith.constant 0 : i32
    %c0_i32_1 = arith.constant 0 : i32
    return %c0_i32, %c0_i32_0 : i32, i32
  }
  func.func @transform_14(%arg0: i32) -> (i32, i32, i32) {
    %c0_i32 = arith.constant 0 : i32
    %c0_i32_0 = arith.constant 0 : i32
    %c0_i32_1 = arith.constant 0 : i32
    return %c0_i32, %arg0, %c0_i32_0 : i32, i32, i32
  }
}

</mosaic_0001>

<llo_original>
// kernel: _lambda_.1
$region0: #{_lambda_.1}
  #allocation0 [shape = 'u32[]', space=smem, size = 0x4, offset = 0x4, fixed_abs, tag = 'smem constant byte address 0x4 - core index']
  #allocation1 [shape = 'u32[144,128]{1,0:T(1,128)}', space=vmem, size = 0x12000, scoped, tag = 'internal scratch']
  %s0 = inlined_call_operand.vmem [shape: bf16[2,80,64], index: 0, kind: input, shape index: {}]
  %s1 = inlined_call_operand.vmem [shape: bf16[2,80,64], index: 1, kind: input, shape index: {}]
  %s2 = inlined_call_operand.vmem [shape: bf16[64,32], index: 2, kind: input, shape index: {}]
  %s3 = inlined_call_operand.vmem [shape: f32[1,32], index: 3, kind: input, shape index: {}]
  %s4 = inlined_call_operand.vmem [shape: bf16[2,64,32], index: 4, kind: input, shape index: {}]
  %s5 = inlined_call_operand.vmem [shape: f32[2,1,32], index: 5, kind: input, shape index: {}]
  %s6 = inlined_call_operand.vmem [shape: bf16[2,32,64], index: 6, kind: input, shape index: {}]
  %s7 = inlined_call_operand.vmem [shape: f32[2,1,64], index: 7, kind: input, shape index: {}]
  %s8 = inlined_call_operand.vmem [shape: bf16[2,64,32], index: 8, kind: input, shape index: {}]
  %s9 = inlined_call_operand.vmem [shape: f32[2,1,32], index: 9, kind: input, shape index: {}]
  %s10 = inlined_call_operand.vmem [shape: f32[1,32], index: 10, kind: input, shape index: {}]
  %s11 = inlined_call_operand.vmem [shape: f32[1,32], index: 11, kind: input, shape index: {}]
  %s12 = inlined_call_operand.vmem [shape: bf16[32,64], index: 12, kind: input, shape index: {}]
  %s13 = inlined_call_operand.vmem [shape: f32[1,64], index: 13, kind: input, shape index: {}]
  %s14 = inlined_call_operand.vmem [shape: bf16[2,80,64], index: 14, kind: output, shape index: {}]
  %s15 = sld [smem:[#allocation0]]
  $region208: #{_lambda_.1} parent=0
    _
  %s17 = ssub.s32 1, %s15
  %s18 = scalar_select 0, %s17, %s15
  $region1: #{_lambda_.1} parent=0
    #allocation2 [shape = 'u8[16384]{0}', space=vmem, size = 0x4000, scoped, tag = 'input window, operand 0']
    #allocation3 [shape = 'u8[16384]{0}', space=vmem, size = 0x4000, scoped, tag = 'input window, operand 1']
    #allocation4 [shape = 'u8[16384]{0}', space=vmem, size = 0x4000, scoped, tag = 'output window, operand 0']
    loop: start=0, step=1, limit=7
    $region2: #{_lambda_.1} parent=1 // loop_pre_header
      _
    $region3: #{_lambda_.1} parent=1 // loop_header
      %s20 = sphi 0, %s24
      %p21 = scmp.ge.s32.totalorder %s20, 7
      %s30 = sphi 0, %s32
      %s33 = sphi 0, %s30
      %s34 = sphi 0, %s33
      %s50 = sphi 0, %s34
      %s56 = sphi 0, %s58
      %s59 = sphi 0, %s56
      %s60 = sphi 0, %s59
      %s76 = sphi 0, %s60
      %s80 = sphi 0, %s80
      %s82 = sphi 0, %s80
      %s83 = sphi 0, %s82
      %s97 = sphi 0, %s83
      %s101 = sphi 0, %s101
      %s103 = sphi 0, %s101
      %s104 = sphi 0, %s103
      %s118 = sphi 0, %s104
      %s122 = sphi 0, %s122
      %s124 = sphi 0, %s122
      %s125 = sphi 0, %s124
      %s139 = sphi 0, %s125
      %s143 = sphi 0, %s143
      %s145 = sphi 0, %s143
      %s146 = sphi 0, %s145
      %s160 = sphi 0, %s146
      %s164 = sphi 0, %s164
      %s166 = sphi 0, %s164
      %s167 = sphi 0, %s166
      %s181 = sphi 0, %s167
      %s185 = sphi 0, %s185
      %s187 = sphi 0, %s185
      %s188 = sphi 0, %s187
      %s202 = sphi 0, %s188
      %s206 = sphi 0, %s206
      %s208 = sphi 0, %s206
      %s209 = sphi 0, %s208
      %s223 = sphi 0, %s209
      %s227 = sphi 0, %s227
      %s229 = sphi 0, %s227
      %s230 = sphi 0, %s229
      %s244 = sphi 0, %s230
      %s248 = sphi 0, %s248
      %s250 = sphi 0, %s248
      %s251 = sphi 0, %s250
      %s265 = sphi 0, %s251
      %s269 = sphi 0, %s269
      %s271 = sphi 0, %s269
      %s272 = sphi 0, %s271
      %s286 = sphi 0, %s272
      %s290 = sphi 0, %s290
      %s292 = sphi 0, %s290
      %s293 = sphi 0, %s292
      %s307 = sphi 0, %s293
      %s311 = sphi 0, %s311
      %s313 = sphi 0, %s311
      %s314 = sphi 0, %s313
      %s328 = sphi 0, %s314
      %s334 = sphi 0, %s336
      %s337 = sphi 0, %s334
      %s338 = sphi 0, %s337
      %s354 = sphi 0, %s338
    $region4: #{_lambda_.1} parent=1 // loop_header_branch
      %23 = sbr.rel (%p21) target = $region8
    $region5: #{_lambda_.1} parent=1 // loop_body
      %s25 = ssub.s32 %s20, 1
      %s26 = ssub.s32 %s20, 2
      %s27 = sadd.s32 %s20, 1
      %s28 = ssub.s32 %s20, %s27
      %p29 = scmp.eq.s32.totalorder %s28, 0
      %s31 = sadd.s32 %s30, 1
      %s32 = scalar_select %p29, %s30, %s31
      %p35 = pneg %p29
      %p36 = scmp.eq.s32.totalorder %s20, 4
      %p37 = por %p35, %p36
      %p38 = scmp.ne.s32.totalorder %s30, %s33
      %p39 = scmp.eq.s32.totalorder %s20, 0
      %p40 = por %p38, %p39
      %p41 = scmp.ne.s32.totalorder %s30, %s33
      %p42 = scmp.eq.s32.totalorder %s25, 4
      %p43 = por %p41, %p42
      %p44 = scmp.ne.s32.totalorder %s33, %s34
      %p45 = scmp.eq.s32.totalorder %s25, 0
      %p46 = por %p44, %p45
      %p47 = scmp.ne.s32.totalorder %s33, %s34
      %p48 = scmp.eq.s32.totalorder %s26, 4
      %p49 = por %p47, %p48
      %p51 = scmp.ne.s32.totalorder %s34, %s50
      %p52 = scmp.eq.s32.totalorder %s26, 0
      %p53 = por %p51, %p52
      %s54 = ssub.s32 %s20, %s27
      %p55 = scmp.eq.s32.totalorder %s54, 0
      %s57 = sadd.s32 %s56, 1
      %s58 = scalar_select %p55, %s56, %s57
      %p61 = pneg %p55
      %p62 = scmp.eq.s32.totalorder %s20, 4
      %p63 = por %p61, %p62
      %p64 = scmp.ne.s32.totalorder %s56, %s59
      %p65 = scmp.eq.s32.totalorder %s20, 0
      %p66 = por %p64, %p65
      %p67 = scmp.ne.s32.totalorder %s56, %s59
      %p68 = scmp.eq.s32.totalorder %s25, 4
      %p69 = por %p67, %p68
      %p70 = scmp.ne.s32.totalorder %s59, %s60
      %p71 = scmp.eq.s32.totalorder %s25, 0
      %p72 = por %p70, %p71
      %p73 = scmp.ne.s32.totalorder %s59, %s60
      %p74 = scmp.eq.s32.totalorder %s26, 4
      %p75 = por %p73, %p74
      %p77 = scmp.ne.s32.totalorder %s60, %s76
      %p78 = scmp.eq.s32.totalorder %s26, 0
      %p79 = por %p77, %p78
      %s81 = sadd.s32 %s80, 1
      %p84 = scmp.eq.s32.totalorder %s20, 4
      %p85 = scmp.ne.s32.totalorder %s80, %s82
      %p86 = scmp.eq.s32.totalorder %s20, 0
      %p87 = por %p85, %p86
      %p88 = scmp.ne.s32.totalorder %s80, %s82
      %p89 = scmp.eq.s32.totalorder %s25, 4
      %p90 = por %p88, %p89
      %p91 = scmp.ne.s32.totalorder %s82, %s83
      %p92 = scmp.eq.s32.totalorder %s25, 0
      %p93 = por %p91, %p92
      %p94 = scmp.ne.s32.totalorder %s82, %s83
      %p95 = scmp.eq.s32.totalorder %s26, 4
      %p96 = por %p94, %p95
      %p98 = scmp.ne.s32.totalorder %s83, %s97
      %p99 = scmp.eq.s32.totalorder %s26, 0
      %p100 = por %p98, %p99
      %s102 = sadd.s32 %s101, 1
      %p105 = scmp.eq.s32.totalorder %s20, 4
      %p106 = scmp.ne.s32.totalorder %s101, %s103
      %p107 = scmp.eq.s32.totalorder %s20, 0
      %p108 = por %p106, %p107
      %p109 = scmp.ne.s32.totalorder %s101, %s103
      %p110 = scmp.eq.s32.totalorder %s25, 4
      %p111 = por %p109, %p110
      %p112 = scmp.ne.s32.totalorder %s103, %s104
      %p113 = scmp.eq.s32.totalorder %s25, 0
      %p114 = por %p112, %p113
      %p115 = scmp.ne.s32.totalorder %s103, %s104
      %p116 = scmp.eq.s32.totalorder %s26, 4
      %p117 = por %p115, %p116
      %p119 = scmp.ne.s32.totalorder %s104, %s118
      %p120 = scmp.eq.s32.totalorder %s26, 0
      %p121 = por %p119, %p120
      %s123 = sadd.s32 %s122, 1
      %p126 = scmp.eq.s32.totalorder %s20, 4
      %p127 = scmp.ne.s32.totalorder %s122, %s124
      %p128 = scmp.eq.s32.totalorder %s20, 0
      %p129 = por %p127, %p128
      %p130 = scmp.ne.s32.totalorder %s122, %s124
      %p131 = scmp.eq.s32.totalorder %s25, 4
      %p132 = por %p130, %p131
      %p133 = scmp.ne.s32.totalorder %s124, %s125
      %p134 = scmp.eq.s32.totalorder %s25, 0
      %p135 = por %p133, %p134
      %p136 = scmp.ne.s32.totalorder %s124, %s125
      %p137 = scmp.eq.s32.totalorder %s26, 4
      %p138 = por %p136, %p137
      %p140 = scmp.ne.s32.totalorder %s125, %s139
      %p141 = scmp.eq.s32.totalorder %s26, 0
      %p142 = por %p140, %p141
      %s144 = sadd.s32 %s143, 1
      %p147 = scmp.eq.s32.totalorder %s20, 4
      %p148 = scmp.ne.s32.totalorder %s143, %s145
      %p149 = scmp.eq.s32.totalorder %s20, 0
      %p150 = por %p148, %p149
      %p151 = scmp.ne.s32.totalorder %s143, %s145
      %p152 = scmp.eq.s32.totalorder %s25, 4
      %p153 = por %p151, %p152
      %p154 = scmp.ne.s32.totalorder %s145, %s146
      %p155 = scmp.eq.s32.totalorder %s25, 0
      %p156 = por %p154, %p155
      %p157 = scmp.ne.s32.totalorder %s145, %s146
      %p158 = scmp.eq.s32.totalorder %s26, 4
      %p159 = por %p157, %p158
      %p161 = scmp.ne.s32.totalorder %s146, %s160
      %p162 = scmp.eq.s32.totalorder %s26, 0
      %p163 = por %p161, %p162
      %s165 = sadd.s32 %s164, 1
      %p168 = scmp.eq.s32.totalorder %s20, 4
      %p169 = scmp.ne.s32.totalorder %s164, %s166
      %p170 = scmp.eq.s32.totalorder %s20, 0
      %p171 = por %p169, %p170
      %p172 = scmp.ne.s32.totalorder %s164, %s166
      %p173 = scmp.eq.s32.totalorder %s25, 4
      %p174 = por %p172, %p173
      %p175 = scmp.ne.s32.totalorder %s166, %s167
      %p176 = scmp.eq.s32.totalorder %s25, 0
      %p177 = por %p175, %p176
      %p178 = scmp.ne.s32.totalorder %s166, %s167
      %p179 = scmp.eq.s32.totalorder %s26, 4
      %p180 = por %p178, %p179
      %p182 = scmp.ne.s32.totalorder %s167, %s181
      %p183 = scmp.eq.s32.totalorder %s26, 0
      %p184 = por %p182, %p183
      %s186 = sadd.s32 %s185, 1
      %p189 = scmp.eq.s32.totalorder %s20, 4
      %p190 = scmp.ne.s32.totalorder %s185, %s187
      %p191 = scmp.eq.s32.totalorder %s20, 0
      %p192 = por %p190, %p191
      %p193 = scmp.ne.s32.totalorder %s185, %s187
      %p194 = scmp.eq.s32.totalorder %s25, 4
      %p195 = por %p193, %p194
      %p196 = scmp.ne.s32.totalorder %s187, %s188
      %p197 = scmp.eq.s32.totalorder %s25, 0
      %p198 = por %p196, %p197
      %p199 = scmp.ne.s32.totalorder %s187, %s188
      %p200 = scmp.eq.s32.totalorder %s26, 4
      %p201 = por %p199, %p200
      %p203 = scmp.ne.s32.totalorder %s188, %s202
      %p204 = scmp.eq.s32.totalorder %s26, 0
      %p205 = por %p203, %p204
      %s207 = sadd.s32 %s206, 1
      %p210 = scmp.eq.s32.totalorder %s20, 4
      %p211 = scmp.ne.s32.totalorder %s206, %s208
      %p212 = scmp.eq.s32.totalorder %s20, 0
      %p213 = por %p211, %p212
      %p214 = scmp.ne.s32.totalorder %s206, %s208
      %p215 = scmp.eq.s32.totalorder %s25, 4
      %p216 = por %p214, %p215
      %p217 = scmp.ne.s32.totalorder %s208, %s209
      %p218 = scmp.eq.s32.totalorder %s25, 0
      %p219 = por %p217, %p218
      %p220 = scmp.ne.s32.totalorder %s208, %s209
      %p221 = scmp.eq.s32.totalorder %s26, 4
      %p222 = por %p220, %p221
      %p224 = scmp.ne.s32.totalorder %s209, %s223
      %p225 = scmp.eq.s32.totalorder %s26, 0
      %p226 = por %p224, %p225
      %s228 = sadd.s32 %s227, 1
      %p231 = scmp.eq.s32.totalorder %s20, 4
      %p232 = scmp.ne.s32.totalorder %s227, %s229
      %p233 = scmp.eq.s32.totalorder %s20, 0
      %p234 = por %p232, %p233
      %p235 = scmp.ne.s32.totalorder %s227, %s229
      %p236 = scmp.eq.s32.totalorder %s25, 4
      %p237 = por %p235, %p236
      %p238 = scmp.ne.s32.totalorder %s229, %s230
      %p239 = scmp.eq.s32.totalorder %s25, 0
      %p240 = por %p238, %p239
      %p241 = scmp.ne.s32.totalorder %s229, %s230
      %p242 = scmp.eq.s32.totalorder %s26, 4
      %p243 = por %p241, %p242
      %p245 = scmp.ne.s32.totalorder %s230, %s244
      %p246 = scmp.eq.s32.totalorder %s26, 0
      %p247 = por %p245, %p246
      %s249 = sadd.s32 %s248, 1
      %p252 = scmp.eq.s32.totalorder %s20, 4
      %p253 = scmp.ne.s32.totalorder %s248, %s250
      %p254 = scmp.eq.s32.totalorder %s20, 0
      %p255 = por %p253, %p254
      %p256 = scmp.ne.s32.totalorder %s248, %s250
      %p257 = scmp.eq.s32.totalorder %s25, 4
      %p258 = por %p256, %p257
      %p259 = scmp.ne.s32.totalorder %s250, %s251
      %p260 = scmp.eq.s32.totalorder %s25, 0
      %p261 = por %p259, %p260
      %p262 = scmp.ne.s32.totalorder %s250, %s251
      %p263 = scmp.eq.s32.totalorder %s26, 4
      %p264 = por %p262, %p263
      %p266 = scmp.ne.s32.totalorder %s251, %s265
      %p267 = scmp.eq.s32.totalorder %s26, 0
      %p268 = por %p266, %p267
      %s270 = sadd.s32 %s269, 1
      %p273 = scmp.eq.s32.totalorder %s20, 4
      %p274 = scmp.ne.s32.totalorder %s269, %s271
      %p275 = scmp.eq.s32.totalorder %s20, 0
      %p276 = por %p274, %p275
      %p277 = scmp.ne.s32.totalorder %s269, %s271
      %p278 = scmp.eq.s32.totalorder %s25, 4
      %p279 = por %p277, %p278
      %p280 = scmp.ne.s32.totalorder %s271, %s272
      %p281 = scmp.eq.s32.totalorder %s25, 0
      %p282 = por %p280, %p281
      %p283 = scmp.ne.s32.totalorder %s271, %s272
      %p284 = scmp.eq.s32.totalorder %s26, 4
      %p285 = por %p283, %p284
      %p287 = scmp.ne.s32.totalorder %s272, %s286
      %p288 = scmp.eq.s32.totalorder %s26, 0
      %p289 = por %p287, %p288
      %s291 = sadd.s32 %s290, 1
      %p294 = scmp.eq.s32.totalorder %s20, 4
      %p295 = scmp.ne.s32.totalorder %s290, %s292
      %p296 = scmp.eq.s32.totalorder %s20, 0
      %p297 = por %p295, %p296
      %p298 = scmp.ne.s32.totalorder %s290, %s292
      %p299 = scmp.eq.s32.totalorder %s25, 4
      %p300 = por %p298, %p299
      %p301 = scmp.ne.s32.totalorder %s292, %s293
      %p302 = scmp.eq.s32.totalorder %s25, 0
      %p303 = por %p301, %p302
      %p304 = scmp.ne.s32.totalorder %s292, %s293
      %p305 = scmp.eq.s32.totalorder %s26, 4
      %p306 = por %p304, %p305
      %p308 = scmp.ne.s32.totalorder %s293, %s307
      %p309 = scmp.eq.s32.totalorder %s26, 0
      %p310 = por %p308, %p309
      %s312 = sadd.s32 %s311, 1
      %p315 = scmp.eq.s32.totalorder %s20, 4
      %p316 = scmp.ne.s32.totalorder %s311, %s313
      %p317 = scmp.eq.s32.totalorder %s20, 0
      %p318 = por %p316, %p317
      %p319 = scmp.ne.s32.totalorder %s311, %s313
      %p320 = scmp.eq.s32.totalorder %s25, 4
      %p321 = por %p319, %p320
      %p322 = scmp.ne.s32.totalorder %s313, %s314
      %p323 = scmp.eq.s32.totalorder %s25, 0
      %p324 = por %p322, %p323
      %p325 = scmp.ne.s32.totalorder %s313, %s314
      %p326 = scmp.eq.s32.totalorder %s26, 4
      %p327 = por %p325, %p326
      %p329 = scmp.ne.s32.totalorder %s314, %s328
      %p330 = scmp.eq.s32.totalorder %s26, 0
      %p331 = por %p329, %p330
      %s332 = ssub.s32 %s20, %s27
      %p333 = scmp.eq.s32.totalorder %s332, 0
      %s335 = sadd.s32 %s334, 1
      %s336 = scalar_select %p333, %s334, %s335
      %p339 = pneg %p333
      %p340 = scmp.eq.s32.totalorder %s20, 4
      %p341 = por %p339, %p340
      %p342 = scmp.ne.s32.totalorder %s334, %s337
      %p343 = scmp.eq.s32.totalorder %s20, 0
      %p344 = por %p342, %p343
      %p345 = scmp.ne.s32.totalorder %s334, %s337
      %p346 = scmp.eq.s32.totalorder %s25, 4
      %p347 = por %p345, %p346
      %p348 = scmp.ne.s32.totalorder %s337, %s338
      %p349 = scmp.eq.s32.totalorder %s25, 0
      %p350 = por %p348, %p349
      %p351 = scmp.ne.s32.totalorder %s337, %s338
      %p352 = scmp.eq.s32.totalorder %s26, 4
      %p353 = por %p351, %p352
      %p355 = scmp.ne.s32.totalorder %s338, %s354
      %p356 = scmp.eq.s32.totalorder %s26, 0
      %p357 = por %p355, %p356
      %p358 = scmp.le.s32.totalorder 1, %s20
      %p359 = scmp.lt.s32.totalorder %s20, 6
      %p360 = pnand %p358, %p359
      %p361 = pneg %p360
      // Predicated region
      $region9: #{_lambda_.1} parent=5 // pred_check
        _
      $region10: #{_lambda_.1} parent=5 // pred_check_branch
        %363 = sbr.rel (%p360) target = $region12
      $region11: #{_lambda_.1} parent=5 // pred_region
        %s364 = ssub.s32 %s20, 1
        // Predicated region
        $region13: #{_lambda_.1} parent=11 // pred_check
          %p365 = pneg %p93
        $region14: #{_lambda_.1} parent=11 // pred_check_branch
          %367 = sbr.rel (%p365) target = $region16
        $region15: #{_lambda_.1} parent=11 // pred_region
          _
        $region16: #{_lambda_.1} parent=11 // pred_fallthru
          _
        // Predicated region
        $region17: #{_lambda_.1} parent=11 // pred_check
          %p368 = pneg %p114
        $region18: #{_lambda_.1} parent=11 // pred_check_branch
          %370 = sbr.rel (%p368) target = $region20
        $region19: #{_lambda_.1} parent=11 // pred_region
          _
        $region20: #{_lambda_.1} parent=11 // pred_fallthru
          _
        // Predicated region
        $region21: #{_lambda_.1} parent=11 // pred_check
          %p371 = pneg %p135
        $region22: #{_lambda_.1} parent=11 // pred_check_branch
          %373 = sbr.rel (%p371) target = $region24
        $region23: #{_lambda_.1} parent=11 // pred_region
          _
        $region24: #{_lambda_.1} parent=11 // pred_fallthru
          _
        // Predicated region
        $region25: #{_lambda_.1} parent=11 // pred_check
          %p374 = pneg %p156
        $region26: #{_lambda_.1} parent=11 // pred_check_branch
          %376 = sbr.rel (%p374) target = $region28
        $region27: #{_lambda_.1} parent=11 // pred_region
          _
        $region28: #{_lambda_.1} parent=11 // pred_fallthru
          _
        // Predicated region
        $region29: #{_lambda_.1} parent=11 // pred_check
          %p377 = pneg %p177
        $region30: #{_lambda_.1} parent=11 // pred_check_branch
          %379 = sbr.rel (%p377) target = $region32
        $region31: #{_lambda_.1} parent=11 // pred_region
          _
        $region32: #{_lambda_.1} parent=11 // pred_fallthru
          _
        // Predicated region
        $region33: #{_lambda_.1} parent=11 // pred_check
          %p380 = pneg %p198
        $region34: #{_lambda_.1} parent=11 // pred_check_branch
          %382 = sbr.rel (%p380) target = $region36
        $region35: #{_lambda_.1} parent=11 // pred_region
          _
        $region36: #{_lambda_.1} parent=11 // pred_fallthru
          _
        // Predicated region
        $region37: #{_lambda_.1} parent=11 // pred_check
          %p383 = pneg %p219
        $region38: #{_lambda_.1} parent=11 // pred_check_branch
          %385 = sbr.rel (%p383) target = $region40
        $region39: #{_lambda_.1} parent=11 // pred_region
          _
        $region40: #{_lambda_.1} parent=11 // pred_fallthru
          _
        // Predicated region
        $region41: #{_lambda_.1} parent=11 // pred_check
          %p386 = pneg %p240
        $region42: #{_lambda_.1} parent=11 // pred_check_branch
          %388 = sbr.rel (%p386) target = $region44
        $region43: #{_lambda_.1} parent=11 // pred_region
          _
        $region44: #{_lambda_.1} parent=11 // pred_fallthru
          _
        // Predicated region
        $region45: #{_lambda_.1} parent=11 // pred_check
          %p389 = pneg %p261
        $region46: #{_lambda_.1} parent=11 // pred_check_branch
          %391 = sbr.rel (%p389) target = $region48
        $region47: #{_lambda_.1} parent=11 // pred_region
          _
        $region48: #{_lambda_.1} parent=11 // pred_fallthru
          _
        // Predicated region
        $region49: #{_lambda_.1} parent=11 // pred_check
          %p392 = pneg %p282
        $region50: #{_lambda_.1} parent=11 // pred_check_branch
          %394 = sbr.rel (%p392) target = $region52
        $region51: #{_lambda_.1} parent=11 // pred_region
          _
        $region52: #{_lambda_.1} parent=11 // pred_fallthru
          _
        // Predicated region
        $region53: #{_lambda_.1} parent=11 // pred_check
          %p395 = pneg %p303
        $region54: #{_lambda_.1} parent=11 // pred_check_branch
          %397 = sbr.rel (%p395) target = $region56
        $region55: #{_lambda_.1} parent=11 // pred_region
          _
        $region56: #{_lambda_.1} parent=11 // pred_fallthru
          _
        // Predicated region
        $region57: #{_lambda_.1} parent=11 // pred_check
          %p398 = pneg %p324
        $region58: #{_lambda_.1} parent=11 // pred_check_branch
          %400 = sbr.rel (%p398) target = $region60
        $region59: #{_lambda_.1} parent=11 // pred_region
          _
        $region60: #{_lambda_.1} parent=11 // pred_fallthru
          _
      $region12: #{_lambda_.1} parent=5 // pred_fallthru
        _
      %p401 = scmp.lt.s32.totalorder %s20, 5
      // Predicated region
      $region61: #{_lambda_.1} parent=5 // pred_check
        %p402 = pneg %p401
      $region62: #{_lambda_.1} parent=5 // pred_check_branch
        %404 = sbr.rel (%p402) target = $region64
      $region63: #{_lambda_.1} parent=5 // pred_region
        // Predicated region
        $region65: #{_lambda_.1} parent=63 // pred_check
          %p405 = pneg %p40
        $region66: #{_lambda_.1} parent=63 // pred_check_branch
          %407 = sbr.rel (%p405) target = $region68
        $region67: #{_lambda_.1} parent=63 // pred_region
          %s408 = sand.u32 %s30, 1
          %s409 = sand.u32 %s30, 1
          %s410 = smul.addr %s409, 16
          %s411 = scalar_lea.vmem [#allocation2], %s410
          %s412 = smul.u32 2, %s20
          %s413 = smul.addr %s412, 4
          %s414 = scalar_lea.vmem %s0, %s413
          // Predicated region
          $region69: #{_lambda_.1} parent=67 // pred_check
            _
          $region70: #{_lambda_.1} parent=67 // pred_check_branch
            %416 = sbr.rel (0) target = $region72
          $region71: #{_lambda_.1} parent=67 // pred_region
            // Predicated region
            $region73: #{_lambda_.1} parent=71 // pred_check
              _
            $region74: #{_lambda_.1} parent=71 // pred_check_branch
              %418 = sbr.rel target = $region76
            $region75: #{_lambda_.1} parent=71 // pred_region
              // Predicated region
              $region88: #{_lambda_.1} parent=75 // pred_check
                _
              $region89: #{_lambda_.1} parent=75 // pred_check_branch
                %440 = sbr.rel (0) target = $region91
              $region90: #{_lambda_.1} parent=75 // pred_region
                loop: start=0, step=1, limit=1
                $region92: #{_lambda_.1} parent=90 // loop_pre_header
                  _
                $region93: #{_lambda_.1} parent=90 // loop_header
                  %s442 = sphi 0, %s446
                  %p443 = scmp.ge.s32.totalorder %s442, 1
                  %s447 = sphi %s414, %s414
                  %s448 = sphi %s411, %s411
                $region94: #{_lambda_.1} parent=90 // loop_header_branch
                  %445 = sbr.rel (%p443) target = $region98
                $region95: #{_lambda_.1} parent=90 // loop_body
                  _
                $region96: #{_lambda_.1} parent=90 // loop_footer
                  %s446 = sadd.s32 1, %s442
                $region97: #{_lambda_.1} parent=90 // loop_footer_branch
                  %441 = sbr.rel target = $region93
                $region98: #{_lambda_.1} parent=90 // loop_exit
                  _
                %s450 = ssub.s32 16, 1
                loop: start=0, step=1, limit=1
                $region99: #{_lambda_.1} parent=90 // loop_pre_header
                  _
                $region100: #{_lambda_.1} parent=90 // loop_header
                  %s452 = sphi 0, %s456
                  %p453 = scmp.ge.s32.totalorder %s452, 1
                  %s457 = sphi %s414, %s414
                  %s458 = sphi %s411, %s411
                $region101: #{_lambda_.1} parent=90 // loop_header_branch
                  %455 = sbr.rel (%p453) target = $region105
                $region102: #{_lambda_.1} parent=90 // loop_body
                  %v459 = vld [vmem:[%s457] sm:%s450]
                  %460 = vst [vmem:[%s458] sm:%s450] %v459
                  %v461 = vld [vmem:[%s457 + $0x4] sm:%s450]
                  %462 = vst [vmem:[%s458 + $0x4] sm:%s450] %v461
                  %v463 = vld [vmem:[%s457 + $0x28] sm:%s450]
                  %464 = vst [vmem:[%s458 + $0x8] sm:%s450] %v463
                  %v465 = vld [vmem:[%s457 + $0x2c] sm:%s450]
                  %466 = vst [vmem:[%s458 + $0xc] sm:%s450] %v465
                $region103: #{_lambda_.1} parent=90 // loop_footer
                  %s456 = sadd.s32 1, %s452
                $region104: #{_lambda_.1} parent=90 // loop_footer_branch
                  %451 = sbr.rel target = $region100
                $region105: #{_lambda_.1} parent=90 // loop_exit
                  _
              $region91: #{_lambda_.1} parent=75 // pred_fallthru
                _
            $region76: #{_lambda_.1} parent=71 // pred_fallthru
              _
            // Predicated region
            $region77: #{_lambda_.1} parent=71 // pred_check
              _
            $region78: #{_lambda_.1} parent=71 // pred_check_branch
              %420 = sbr.rel (0) target = $region80
            $region79: #{_lambda_.1} parent=71 // pred_region
              %s422 = ssub.s32 16, 1
              loop: start=0, step=1, limit=1
              $region81: #{_lambda_.1} parent=79 // loop_pre_header
                _
              $region82: #{_lambda_.1} parent=79 // loop_header
                %s424 = sphi 0, %s428
                %p425 = scmp.ge.s32.totalorder %s424, 1
                %s429 = sphi %s414, %s414
                %s430 = sphi %s411, %s411
              $region83: #{_lambda_.1} parent=79 // loop_header_branch
                %427 = sbr.rel (%p425) target = $region87
              $region84: #{_lambda_.1} parent=79 // loop_body
                %v431 = vld [vmem:[%s429] sm:%s422]
                %432 = vst [vmem:[%s430] sm:%s422] %v431
                %v433 = vld [vmem:[%s429 + $0x4] sm:%s422]
                %434 = vst [vmem:[%s430 + $0x4] sm:%s422] %v433
                %v435 = vld [vmem:[%s429 + $0x28] sm:%s422]
                %436 = vst [vmem:[%s430 + $0x8] sm:%s422] %v435
                %v437 = vld [vmem:[%s429 + $0x2c] sm:%s422]
                %438 = vst [vmem:[%s430 + $0xc] sm:%s422] %v437
              $region85: #{_lambda_.1} parent=79 // loop_footer
                %s428 = sadd.s32 1, %s424
              $region86: #{_lambda_.1} parent=79 // loop_footer_branch
                %423 = sbr.rel target = $region82
              $region87: #{_lambda_.1} parent=79 // loop_exit
                _
            $region80: #{_lambda_.1} parent=71 // pred_fallthru
              _
          $region72: #{_lambda_.1} parent=67 // pred_fallthru
            _
          %467 = vnop
        $region68: #{_lambda_.1} parent=63 // pred_fallthru
          _
        // Predicated region
        $region106: #{_lambda_.1} parent=63 // pred_check
          %p468 = pneg %p66
        $region107: #{_lambda_.1} parent=63 // pred_check_branch
          %470 = sbr.rel (%p468) target = $region109
        $region108: #{_lambda_.1} parent=63 // pred_region
          %s471 = sand.u32 %s56, 1
          %s472 = sand.u32 %s56, 1
          %s473 = smul.addr %s472, 16
          %s474 = scalar_lea.vmem [#allocation3], %s473
          %s475 = smul.u32 2, %s20
          %s476 = smul.addr %s475, 4
          %s477 = scalar_lea.vmem %s1, %s476
          // Predicated region
          $region110: #{_lambda_.1} parent=108 // pred_check
            _
          $region111: #{_lambda_.1} parent=108 // pred_check_branch
            %479 = sbr.rel (0) target = $region113
          $region112: #{_lambda_.1} parent=108 // pred_region
            // Predicated region
            $region114: #{_lambda_.1} parent=112 // pred_check
              _
            $region115: #{_lambda_.1} parent=112 // pred_check_branch
              %481 = sbr.rel target = $region117
            $region116: #{_lambda_.1} parent=112 // pred_region
              // Predicated region
              $region129: #{_lambda_.1} parent=116 // pred_check
                _
              $region130: #{_lambda_.1} parent=116 // pred_check_branch
                %503 = sbr.rel (0) target = $region132
              $region131: #{_lambda_.1} parent=116 // pred_region
                loop: start=0, step=1, limit=1
                $region133: #{_lambda_.1} parent=131 // loop_pre_header
                  _
                $region134: #{_lambda_.1} parent=131 // loop_header
                  %s505 = sphi 0, %s509
                  %p506 = scmp.ge.s32.totalorder %s505, 1
                  %s510 = sphi %s477, %s477
                  %s511 = sphi %s474, %s474
                $region135: #{_lambda_.1} parent=131 // loop_header_branch
                  %508 = sbr.rel (%p506) target = $region139
                $region136: #{_lambda_.1} parent=131 // loop_body
                  _
                $region137: #{_lambda_.1} parent=131 // loop_footer
                  %s509 = sadd.s32 1, %s505
                $region138: #{_lambda_.1} parent=131 // loop_footer_branch
                  %504 = sbr.rel target = $region134
                $region139: #{_lambda_.1} parent=131 // loop_exit
                  _
                %s513 = ssub.s32 16, 1
                loop: start=0, step=1, limit=1
                $region140: #{_lambda_.1} parent=131 // loop_pre_header
                  _
                $region141: #{_lambda_.1} parent=131 // loop_header
                  %s515 = sphi 0, %s519
                  %p516 = scmp.ge.s32.totalorder %s515, 1
                  %s520 = sphi %s477, %s477
                  %s521 = sphi %s474, %s474
                $region142: #{_lambda_.1} parent=131 // loop_header_branch
                  %518 = sbr.rel (%p516) target = $region146
                $region143: #{_lambda_.1} parent=131 // loop_body
                  %v522 = vld [vmem:[%s520] sm:%s513]
                  %523 = vst [vmem:[%s521] sm:%s513] %v522
                  %v524 = vld [vmem:[%s520 + $0x4] sm:%s513]
                  %525 = vst [vmem:[%s521 + $0x4] sm:%s513] %v524
                  %v526 = vld [vmem:[%s520 + $0x28] sm:%s513]
                  %527 = vst [vmem:[%s521 + $0x8] sm:%s513] %v526
                  %v528 = vld [vmem:[%s520 + $0x2c] sm:%s513]
                  %529 = vst [vmem:[%s521 + $0xc] sm:%s513] %v528
                $region144: #{_lambda_.1} parent=131 // loop_footer
                  %s519 = sadd.s32 1, %s515
                $region145: #{_lambda_.1} parent=131 // loop_footer_branch
                  %514 = sbr.rel target = $region141
                $region146: #{_lambda_.1} parent=131 // loop_exit
                  _
              $region132: #{_lambda_.1} parent=116 // pred_fallthru
                _
            $region117: #{_lambda_.1} parent=112 // pred_fallthru
              _
            // Predicated region
            $region118: #{_lambda_.1} parent=112 // pred_check
              _
            $region119: #{_lambda_.1} parent=112 // pred_check_branch
              %483 = sbr.rel (0) target = $region121
            $region120: #{_lambda_.1} parent=112 // pred_region
              %s485 = ssub.s32 16, 1
              loop: start=0, step=1, limit=1
              $region122: #{_lambda_.1} parent=120 // loop_pre_header
                _
              $region123: #{_lambda_.1} parent=120 // loop_header
                %s487 = sphi 0, %s491
                %p488 = scmp.ge.s32.totalorder %s487, 1
                %s492 = sphi %s477, %s477
                %s493 = sphi %s474, %s474
              $region124: #{_lambda_.1} parent=120 // loop_header_branch
                %490 = sbr.rel (%p488) target = $region128
              $region125: #{_lambda_.1} parent=120 // loop_body
                %v494 = vld [vmem:[%s492] sm:%s485]
                %495 = vst [vmem:[%s493] sm:%s485] %v494
                %v496 = vld [vmem:[%s492 + $0x4] sm:%s485]
                %497 = vst [vmem:[%s493 + $0x4] sm:%s485] %v496
                %v498 = vld [vmem:[%s492 + $0x28] sm:%s485]
                %499 = vst [vmem:[%s493 + $0x8] sm:%s485] %v498
                %v500 = vld [vmem:[%s492 + $0x2c] sm:%s485]
                %501 = vst [vmem:[%s493 + $0xc] sm:%s485] %v500
              $region126: #{_lambda_.1} parent=120 // loop_footer
                %s491 = sadd.s32 1, %s487
              $region127: #{_lambda_.1} parent=120 // loop_footer_branch
                %486 = sbr.rel target = $region123
              $region128: #{_lambda_.1} parent=120 // loop_exit
                _
            $region121: #{_lambda_.1} parent=112 // pred_fallthru
              _
          $region113: #{_lambda_.1} parent=108 // pred_fallthru
            _
          %530 = vnop
        $region109: #{_lambda_.1} parent=63 // pred_fallthru
          _
      $region64: #{_lambda_.1} parent=5 // pred_fallthru
        _
      %p531 = scmp.le.s32.totalorder 1, %s20
      %p532 = scmp.lt.s32.totalorder %s20, 6
      %p533 = pnand %p531, %p532
      %p534 = pneg %p533
      // Predicated region
      $region147: #{_lambda_.1} parent=5 // pred_check
        _
      $region148: #{_lambda_.1} parent=5 // pred_check_branch
        %536 = sbr.rel (%p533) target = $region150
      $region149: #{_lambda_.1} parent=5 // pred_region
        %s537 = ssub.s32 %s20, 1
        %s538 = sand.u32 %s33, 1
        %s539 = sand.u32 %s33, 1
        %s540 = smul.addr %s539, 16
        %s541 = scalar_lea.vmem [#allocation2], %s540
        // Predicated region
        $region151: #{_lambda_.1} parent=149 // pred_check
          %p542 = pneg %p46
        $region152: #{_lambda_.1} parent=149 // pred_check_branch
          %544 = sbr.rel (%p542) target = $region154
        $region153: #{_lambda_.1} parent=149 // pred_region
          _
        $region154: #{_lambda_.1} parent=149 // pred_fallthru
          _
        %s545 = sand.u32 %s59, 1
        %s546 = sand.u32 %s59, 1
        %s547 = smul.addr %s546, 16
        %s548 = scalar_lea.vmem [#allocation3], %s547
        // Predicated region
        $region155: #{_lambda_.1} parent=149 // pred_check
          %p549 = pneg %p72
        $region156: #{_lambda_.1} parent=149 // pred_check_branch
          %551 = sbr.rel (%p549) target = $region158
        $region157: #{_lambda_.1} parent=149 // pred_region
          _
        $region158: #{_lambda_.1} parent=149 // pred_fallthru
          _
        %s552 = sand.u32 %s33, 1
        %s553 = sand.u32 %s33, 1
        %s554 = smul.addr %s553, 16
        %s555 = scalar_lea.vmem [#allocation2], %s554
        %p556 = pneg %p46
        %p557 = pneg %p43
        %s558 = sand.u32 %s59, 1
        %s559 = sand.u32 %s59, 1
        %s560 = smul.addr %s559, 16
        %s561 = scalar_lea.vmem [#allocation3], %s560
        %p562 = pneg %p72
        %p563 = pneg %p69
        %p564 = pneg %p93
        %p565 = pneg %p90
        %p566 = pneg %p114
        %p567 = pneg %p111
        %p568 = pneg %p135
        %p569 = pneg %p132
        %p570 = pneg %p156
        %p571 = pneg %p153
        %p572 = pneg %p177
        %p573 = pneg %p174
        %p574 = pneg %p198
        %p575 = pneg %p195
        %p576 = pneg %p219
        %p577 = pneg %p216
        %p578 = pneg %p240
        %p579 = pneg %p237
        %p580 = pneg %p261
        %p581 = pneg %p258
        %p582 = pneg %p282
        %p583 = pneg %p279
        %p584 = pneg %p303
        %p585 = pneg %p300
        %p586 = pneg %p324
        %p587 = pneg %p321
        %p588 = pneg %p350
        %p589 = pneg %p347
        %s590 = sand.u32 %s337, 1
        %s591 = sand.u32 %s337, 1
        %s592 = smul.addr %s591, 16
        %s593 = scalar_lea.vmem [#allocation4], %s592
        %s594 = smul.u32 2, %s25
        %s595 = smul.u32 2, %s25
        %s596 = smul.u32 2, %s25
        %s598 = smul.u32 %s25, 16
        %p599 = scmp.ge.s32.totalorder %s598, 16
        %s600 = scalar_select %p599, 1, 0
        %v601 = vld [vmem:[%s541] sm:$0xf]
        %v602 = vld [vmem:[%s541 + $0x4] sm:$0xf]
        %v603 = vld [vmem:[%s541 + $0x8] sm:$0xf]
        %v604 = vld [vmem:[%s541 + $0xc] sm:$0xf]
        %v605 = vld [vmem:[%s548] sm:$0xf]
        %v606 = vld [vmem:[%s548 + $0x4] sm:$0xf]
        %v607 = vld [vmem:[%s548 + $0x8] sm:$0xf]
        %v608 = vld [vmem:[%s548 + $0xc] sm:$0xf]
        %v609 = vld [vmem:[%s2] sm:$0xf]
        %v610 = vld [vmem:[%s2 + $0x4] sm:$0xf]
        %v611 = vld [vmem:[%s2 + $0x8] sm:$0xf]
        %v612 = vld [vmem:[%s2 + $0xc] sm:$0xf]
        %v613 = vld [vmem:[%s2 + $0x10] sm:$0xf]
        %v614 = vld [vmem:[%s2 + $0x14] sm:$0xf]
        %v615 = vld [vmem:[%s2 + $0x18] sm:$0xf]
        %v616 = vld [vmem:[%s2 + $0x1c] sm:$0xf]
        %v617 = vld [vmem:[%s3] sm:$0x1]
        %v619 = vlaneseq
        %v620 = vshrl.u32 %v619, 7
        %v621 = vsub.s32 0, %v620
        %v622 = vrot.slane %v617, %v621
        %v628 = vunpack.c.l.b16 %v601
        %v629 = vunpack.c.l.b16 %v602
        %v630 = vunpack.c.l.b16 %v603
        %v631 = vunpack.c.l.b16 %v604
        %v632 = vpack.c.b16 %v629, %v628
        %v633 = vpack.c.b16 %v631, %v630
        %v642 = vunpack.c.l.b16 %v609
        %v643 = vunpack.c.l.b16 %v610
        %v644 = vunpack.c.l.b16 %v611
        %v645 = vunpack.c.l.b16 %v612
        %v646 = vunpack.c.l.b16 %v613
        %v647 = vunpack.c.l.b16 %v614
        %v648 = vunpack.c.l.b16 %v615
        %v649 = vunpack.c.l.b16 %v616
        %v650 = vpack.c.b16 %v643, %v642
        %v651 = vpack.c.b16 %v645, %v644
        %v652 = vpack.c.b16 %v647, %v646
        %v653 = vpack.c.b16 %v649, %v648
        %vm658 = vcmask 523264
        %v660 = vsel %vm658, %v632, 0
        %v663 = vsel %vm658, %v633, 0
        %665 = vmatprep.subr.bf16.mxu0 0
        %666 = vmatpush1.bf16.msra.mxu0 0
        %667 = vmatprep.subr.bf16.mxu0 0
        %668 = vmatpush1.bf16.msra.mxu0 0
        %669 = vmatprep.subr.bf16.mxu0 0
        %670 = vmatpush1.bf16.msra.mxu0 0
        %671 = vmatprep.subr.bf16.mxu0 0
        %672 = vmatpush1.bf16.msra.mxu0 0
        %673 = vmatprep.subr.bf16.mxu0 0
        %674 = vmatpush1.bf16.msra.mxu0 %v653
        %675 = vmatprep.subr.bf16.mxu0 0
        %676 = vmatpush1.bf16.msra.mxu0 %v652
        %677 = vmatprep.subr.bf16.mxu0 0
        %678 = vmatpush1.bf16.msra.mxu0 %v651
        %679 = vmatprep.subr.bf16.mxu0 0
        %680 = vmatpush1.bf16.msra.mxu0 %v650
        %681 = vmatprep.subr.bf16.mxu0 0
        %682 = vmatpush2.bf16.msra.mxu0 0
        %683 = vmatprep.subr.bf16.mxu0 0
        %684 = vmatpush2.bf16.msra.mxu0 0
        %685 = vmatprep.subr.bf16.mxu0 0
        %686 = vmatpush2.bf16.msra.mxu0 0
        %687 = vmatprep.subr.bf16.mxu0 0
        %688 = vmatpush2.bf16.msra.mxu0 0
        %689 = vmatprep.subr.bf16.mxu0 0
        %690 = vmatpush2.bf16.msra.mxu0 0
        %691 = vmatprep.subr.bf16.mxu0 0
        %692 = vmatpush2.bf16.msra.mxu0 0
        %693 = vmatprep.subr.bf16.mxu0 0
        %694 = vmatpush2.bf16.msra.mxu0 0
        %695 = vmatprep.subr.bf16.mxu0 0
        %696 = vmatpush2.bf16.msra.mxu0 0
        %697 = vmatprep.mubr.bf16.mxu0 0
        %698 = vmatmul.mubr.bf16.gmra.mxu0 %v660
        %v699 = vpop.f32.mrf.mxu0
        %v700 = vadd.f32 %v622, %v699
        %v701 = vpop.f32.mrf.mxu0
        %v702 = vpop.f32.mrf.mxu0
        %v703 = vadd.f32 %v622, %v702
        %v704 = vpop.f32.mrf.mxu0
        %705 = vmatprep.mubr.bf16.mxu0 0
        %706 = vmatmul.mubr.bf16.gmra.mxu0 %v663
        %v707 = vpop.f32.mrf.mxu0
        %v708 = vadd.f32 %v622, %v707
        %v709 = vpop.f32.mrf.mxu0
        %v710 = vpop.f32.mrf.mxu0
        %v711 = vadd.f32 %v622, %v710
        %v712 = vpop.f32.mrf.mxu0
        %713 = vdwg.mxu0
        %v718 = vunpack.c.l.b16 %v605
        %v719 = vunpack.c.l.b16 %v606
        %v720 = vunpack.c.l.b16 %v607
        %v721 = vunpack.c.l.b16 %v608
        %v722 = vpack.c.b16 %v719, %v718
        %v723 = vpack.c.b16 %v721, %v720
        %v725 = vsel %vm658, %v722, 0
        %v728 = vsel %vm658, %v723, 0
        %730 = vmatprep.subr.bf16.mxu0 0
        %731 = vmatpush1.bf16.msra.mxu0 0
        %732 = vmatprep.subr.bf16.mxu0 0
        %733 = vmatpush1.bf16.msra.mxu0 0
        %734 = vmatprep.subr.bf16.mxu0 0
        %735 = vmatpush1.bf16.msra.mxu0 0
        %736 = vmatprep.subr.bf16.mxu0 0
        %737 = vmatpush1.bf16.msra.mxu0 0
        %738 = vmatprep.subr.bf16.mxu0 0
        %739 = vmatpush1.bf16.msra.mxu0 %v653
        %740 = vmatprep.subr.bf16.mxu0 0
        %741 = vmatpush1.bf16.msra.mxu0 %v652
        %742 = vmatprep.subr.bf16.mxu0 0
        %743 = vmatpush1.bf16.msra.mxu0 %v651
        %744 = vmatprep.subr.bf16.mxu0 0
        %745 = vmatpush1.bf16.msra.mxu0 %v650
        %746 = vmatprep.subr.bf16.mxu0 0
        %747 = vmatpush2.bf16.msra.mxu0 0
        %748 = vmatprep.subr.bf16.mxu0 0
        %749 = vmatpush2.bf16.msra.mxu0 0
        %750 = vmatprep.subr.bf16.mxu0 0
        %751 = vmatpush2.bf16.msra.mxu0 0
        %752 = vmatprep.subr.bf16.mxu0 0
        %753 = vmatpush2.bf16.msra.mxu0 0
        %754 = vmatprep.subr.bf16.mxu0 0
        %755 = vmatpush2.bf16.msra.mxu0 0
        %756 = vmatprep.subr.bf16.mxu0 0
        %757 = vmatpush2.bf16.msra.mxu0 0
        %758 = vmatprep.subr.bf16.mxu0 0
        %759 = vmatpush2.bf16.msra.mxu0 0
        %760 = vmatprep.subr.bf16.mxu0 0
        %761 = vmatpush2.bf16.msra.mxu0 0
        %762 = vmatprep.mubr.bf16.mxu0 0
        %763 = vmatmul.mubr.bf16.gmra.mxu0 %v725
        %v764 = vpop.f32.mrf.mxu0
        %v765 = vadd.f32 %v622, %v764
        %v766 = vpop.f32.mrf.mxu0
        %v767 = vpop.f32.mrf.mxu0
        %v768 = vadd.f32 %v622, %v767
        %v769 = vpop.f32.mrf.mxu0
        %770 = vmatprep.mubr.bf16.mxu0 0
        %771 = vmatmul.mubr.bf16.gmra.mxu0 %v728
        %v772 = vpop.f32.mrf.mxu0
        %v773 = vadd.f32 %v622, %v772
        %v774 = vpop.f32.mrf.mxu0
        %v775 = vpop.f32.mrf.mxu0
        %v776 = vadd.f32 %v622, %v775
        %v777 = vpop.f32.mrf.mxu0
        %778 = vdwg.mxu0
        %v779 = vpack.c.bf16 %v703, %v700
        %v780 = vpack.c.bf16 %v711, %v708
        %v781 = vpack.c.bf16 %v768, %v765
        %v782 = vpack.c.bf16 %v776, %v773
        %785 = vrot.lane.b32.xlu0 %v781, 32
        %v786 = vpop.permute.xlu0 %785
        %787 = vrot.lane.b32.xlu0 %v782, 32
        %v788 = vpop.permute.xlu0 %787
        %vm789 = vcmask 261120
        %v792 = vsel %vm789, %v779, %v786
        %v795 = vsel %vm789, %v780, %v788
        %s796 = smul.u32 %s600, 8
        %s797 = smul.addr %s796, 4
        %s798 = scalar_lea.vmem %s4, %s797
        %v799 = vld [vmem:[%s798] sm:$0xf]
        %v800 = vld [vmem:[%s798 + $0x4] sm:$0xf]
        %v801 = vld [vmem:[%s798 + $0x8] sm:$0xf]
        %v802 = vld [vmem:[%s798 + $0xc] sm:$0xf]
        %v803 = vld [vmem:[%s798 + $0x10] sm:$0xf]
        %v804 = vld [vmem:[%s798 + $0x14] sm:$0xf]
        %v805 = vld [vmem:[%s798 + $0x18] sm:$0xf]
        %v806 = vld [vmem:[%s798 + $0x1c] sm:$0xf]
        %s807 = scalar_lea.vmem %s5, %s600
        %v808 = vld [vmem:[%s807] sm:$0x1]
        %v810 = vlaneseq
        %v811 = vshrl.u32 %v810, 7
        %v812 = vsub.s32 0, %v811
        %v813 = vrot.slane %v808, %v812
        %v823 = vunpack.c.l.b16 %v799
        %v824 = vunpack.c.l.b16 %v800
        %v825 = vunpack.c.l.b16 %v801
        %v826 = vunpack.c.l.b16 %v802
        %v827 = vunpack.c.l.b16 %v803
        %v828 = vunpack.c.l.b16 %v804
        %v829 = vunpack.c.l.b16 %v805
        %v830 = vunpack.c.l.b16 %v806
        %v831 = vpack.c.b16 %v824, %v823
        %v832 = vpack.c.b16 %v826, %v825
        %v833 = vpack.c.b16 %v828, %v827
        %v834 = vpack.c.b16 %v830, %v829
        %v839 = vsel %vm658, %v792, 0
        %v841 = vsel %vm658, %v795, 0
        %843 = vmatprep.subr.bf16.mxu0 0
        %844 = vmatpush1.bf16.msra.mxu0 0
        %845 = vmatprep.subr.bf16.mxu0 0
        %846 = vmatpush1.bf16.msra.mxu0 0
        %847 = vmatprep.subr.bf16.mxu0 0
        %848 = vmatpush1.bf16.msra.mxu0 0
        %849 = vmatprep.subr.bf16.mxu0 0
        %850 = vmatpush1.bf16.msra.mxu0 0
        %851 = vmatprep.subr.bf16.mxu0 0
        %852 = vmatpush1.bf16.msra.mxu0 %v834
        %853 = vmatprep.subr.bf16.mxu0 0
        %854 = vmatpush1.bf16.msra.mxu0 %v833
        %855 = vmatprep.subr.bf16.mxu0 0
        %856 = vmatpush1.bf16.msra.mxu0 %v832
        %857 = vmatprep.subr.bf16.mxu0 0
        %858 = vmatpush1.bf16.msra.mxu0 %v831
        %859 = vmatprep.subr.bf16.mxu0 0
        %860 = vmatpush2.bf16.msra.mxu0 0
        %861 = vmatprep.subr.bf16.mxu0 0
        %862 = vmatpush2.bf16.msra.mxu0 0
        %863 = vmatprep.subr.bf16.mxu0 0
        %864 = vmatpush2.bf16.msra.mxu0 0
        %865 = vmatprep.subr.bf16.mxu0 0
        %866 = vmatpush2.bf16.msra.mxu0 0
        %867 = vmatprep.subr.bf16.mxu0 0
        %868 = vmatpush2.bf16.msra.mxu0 0
        %869 = vmatprep.subr.bf16.mxu0 0
        %870 = vmatpush2.bf16.msra.mxu0 0
        %871 = vmatprep.subr.bf16.mxu0 0
        %872 = vmatpush2.bf16.msra.mxu0 0
        %873 = vmatprep.subr.bf16.mxu0 0
        %874 = vmatpush2.bf16.msra.mxu0 0
        %875 = vmatprep.mubr.bf16.mxu0 0
        %876 = vmatmul.mubr.bf16.gmra.mxu0 %v839
        %v877 = vpop.f32.mrf.mxu0
        %v878 = vadd.f32 %v813, %v877
        %v879 = vpop.f32.mrf.mxu0
        %v880 = vpop.f32.mrf.mxu0
        %v881 = vadd.f32 %v813, %v880
        %v882 = vpop.f32.mrf.mxu0
        %883 = vmatprep.mubr.bf16.mxu0 0
        %884 = vmatmul.mubr.bf16.gmra.mxu0 %v841
        %v885 = vpop.f32.mrf.mxu0
        %v886 = vadd.f32 %v813, %v885
        %v887 = vpop.f32.mrf.mxu0
        %v888 = vpop.f32.mrf.mxu0
        %v889 = vadd.f32 %v813, %v888
        %v890 = vpop.f32.mrf.mxu0
        %891 = vdwg.mxu0
        %v892 = vadd.f32 %v700, %v765
        %v893 = vadd.f32 %v703, %v768
        %v894 = vadd.f32 %v708, %v773
        %v895 = vadd.f32 %v711, %v776
        %v896 = vmul.f32 %v878, %v892
        %v897 = vmul.f32 %v881, %v893
        %v898 = vmul.f32 %v886, %v894
        %v899 = vmul.f32 %v889, %v895
        %v900 = vpack.c.bf16 %v897, %v896
        %v901 = vpack.c.bf16 %v899, %v898
        %s902 = smul.u32 %s600, 4
        %s903 = smul.addr %s902, 4
        %s904 = scalar_lea.vmem %s6, %s903
        %v905 = vld [vmem:[%s904] sm:$0xf]
        %v906 = vld [vmem:[%s904 + $0x4] sm:$0xf]
        %v907 = vld [vmem:[%s904 + $0x8] sm:$0xf]
        %v908 = vld [vmem:[%s904 + $0xc] sm:$0xf]
        %s909 = scalar_lea.vmem %s7, %s600
        %v910 = vld [vmem:[%s909] sm:$0x1]
        %v912 = vlaneseq
        %v913 = vshrl.u32 %v912, 7
        %v914 = vsub.s32 0, %v913
        %v915 = vrot.slane %v910, %v914
        %v921 = vunpack.c.l.b16 %v905
        %v922 = vunpack.c.l.b16 %v906
        %v923 = vunpack.c.l.b16 %v907
        %v924 = vunpack.c.l.b16 %v908
        %v925 = vpack.c.b16 %v922, %v921
        %v926 = vpack.c.b16 %v924, %v923
        %v930 = vsel %vm789, %v900, 0
        %v933 = vsel %vm789, %v901, 0
        %935 = vmatprep.subr.bf16.mxu0 0
        %936 = vmatpush1.bf16.msra.mxu0 0
        %937 = vmatprep.subr.bf16.mxu0 0
        %938 = vmatpush1.bf16.msra.mxu0 0
        %939 = vmatprep.subr.bf16.mxu0 0
        %940 = vmatpush1.bf16.msra.mxu0 0
        %941 = vmatprep.subr.bf16.mxu0 0
        %942 = vmatpush1.bf16.msra.mxu0 0
        %943 = vmatprep.subr.bf16.mxu0 0
        %944 = vmatpush1.bf16.msra.mxu0 0
        %945 = vmatprep.subr.bf16.mxu0 0
        %946 = vmatpush1.bf16.msra.mxu0 0
        %947 = vmatprep.subr.bf16.mxu0 0
        %948 = vmatpush1.bf16.msra.mxu0 %v926
        %949 = vmatprep.subr.bf16.mxu0 0
        %950 = vmatpush1.bf16.msra.mxu0 %v925
        %951 = vmatprep.subr.bf16.mxu0 0
        %952 = vmatpush2.bf16.msra.mxu0 0
        %953 = vmatprep.subr.bf16.mxu0 0
        %954 = vmatpush2.bf16.msra.mxu0 0
        %955 = vmatprep.subr.bf16.mxu0 0
        %956 = vmatpush2.bf16.msra.mxu0 0
        %957 = vmatprep.subr.bf16.mxu0 0
        %958 = vmatpush2.bf16.msra.mxu0 0
        %959 = vmatprep.subr.bf16.mxu0 0
        %960 = vmatpush2.bf16.msra.mxu0 0
        %961 = vmatprep.subr.bf16.mxu0 0
        %962 = vmatpush2.bf16.msra.mxu0 0
        %963 = vmatprep.subr.bf16.mxu0 0
        %964 = vmatpush2.bf16.msra.mxu0 0
        %965 = vmatprep.subr.bf16.mxu0 0
        %966 = vmatpush2.bf16.msra.mxu0 0
        %967 = vmatprep.mubr.bf16.mxu0 0
        %968 = vmatmul.mubr.bf16.gmra.mxu0 %v930
        %v969 = vpop.f32.mrf.mxu0
        %v970 = vadd.f32 %v915, %v969
        %v971 = vpop.f32.mrf.mxu0
        %v972 = vpop.f32.mrf.mxu0
        %v973 = vadd.f32 %v915, %v972
        %v974 = vpop.f32.mrf.mxu0
        %975 = vmatprep.mubr.bf16.mxu0 0
        %976 = vmatmul.mubr.bf16.gmra.mxu0 %v933
        %v977 = vpop.f32.mrf.mxu0
        %v978 = vadd.f32 %v915, %v977
        %v979 = vpop.f32.mrf.mxu0
        %v980 = vpop.f32.mrf.mxu0
        %v981 = vadd.f32 %v915, %v980
        %v982 = vpop.f32.mrf.mxu0
        %983 = vdwg.mxu0
        %v984 = vmul.f32 %v970, 0.5
        %v985 = vmul.f32 %v973, 0.5
        %v986 = vmul.f32 %v978, 0.5
        %v987 = vmul.f32 %v981, 0.5
        %v988 = vmul.f32 %v970, 0.044715
        %v989 = vmul.f32 %v973, 0.044715
        %v990 = vmul.f32 %v978, 0.044715
        %v991 = vmul.f32 %v981, 0.044715
        %v992 = vmul.f32 %v988, %v970
        %v993 = vmul.f32 %v989, %v973
        %v994 = vmul.f32 %v990, %v978
        %v995 = vmul.f32 %v991, %v981
        %v996 = vmul.f32 %v992, %v970
        %v997 = vmul.f32 %v993, %v973
        %v998 = vmul.f32 %v994, %v978
        %v999 = vmul.f32 %v995, %v981
        %v1000 = vadd.f32 %v970, %v996
        %v1001 = vadd.f32 %v973, %v997
        %v1002 = vadd.f32 %v978, %v998
        %v1003 = vadd.f32 %v981, %v999
        %v1004 = vmul.f32 %v1000, 0.7978846
        %v1005 = vmul.f32 %v1001, 0.7978846
        %v1006 = vmul.f32 %v1002, 0.7978846
        %v1007 = vmul.f32 %v1003, 0.7978846
        %v1008 = vtanh.pop %v1004
        %v1009 = vtanh.pop %v1005
        %v1010 = vtanh.pop %v1006
        %v1011 = vtanh.pop %v1007
        %v1012 = vadd.f32 %v1008, 1.0
        %v1013 = vadd.f32 %v1009, 1.0
        %v1014 = vadd.f32 %v1010, 1.0
        %v1015 = vadd.f32 %v1011, 1.0
        %v1016 = vmul.f32 %v984, %v1012
        %v1017 = vmul.f32 %v985, %v1013
        %v1018 = vmul.f32 %v986, %v1014
        %v1019 = vmul.f32 %v987, %v1015
        %v1020 = vpack.c.bf16 %v1017, %v1016
        %v1021 = vpack.c.bf16 %v1019, %v1018
        %s1022 = smul.addr %s796, 4
        %s1023 = scalar_lea.vmem %s8, %s1022
        %v1024 = vld [vmem:[%s1023] sm:$0xf]
        %v1025 = vld [vmem:[%s1023 + $0x4] sm:$0xf]
        %v1026 = vld [vmem:[%s1023 + $0x8] sm:$0xf]
        %v1027 = vld [vmem:[%s1023 + $0xc] sm:$0xf]
        %v1028 = vld [vmem:[%s1023 + $0x10] sm:$0xf]
        %v1029 = vld [vmem:[%s1023 + $0x14] sm:$0xf]
        %v1030 = vld [vmem:[%s1023 + $0x18] sm:$0xf]
        %v1031 = vld [vmem:[%s1023 + $0x1c] sm:$0xf]
        %s1032 = scalar_lea.vmem %s9, %s600
        %v1033 = vld [vmem:[%s1032] sm:$0x1]
        %v1035 = vlaneseq
        %v1036 = vshrl.u32 %v1035, 7
        %v1037 = vsub.s32 0, %v1036
        %v1038 = vrot.slane %v1033, %v1037
        %v1048 = vunpack.c.l.b16 %v1024
        %v1049 = vunpack.c.l.b16 %v1025
        %v1050 = vunpack.c.l.b16 %v1026
        %v1051 = vunpack.c.l.b16 %v1027
        %v1052 = vunpack.c.l.b16 %v1028
        %v1053 = vunpack.c.l.b16 %v1029
        %v1054 = vunpack.c.l.b16 %v1030
        %v1055 = vunpack.c.l.b16 %v1031
        %v1056 = vpack.c.b16 %v1049, %v1048
        %v1057 = vpack.c.b16 %v1051, %v1050
        %v1058 = vpack.c.b16 %v1053, %v1052
        %v1059 = vpack.c.b16 %v1055, %v1054
        %v1065 = vsel %vm658, %v1020, 0
        %v1068 = vsel %vm658, %v1021, 0
        %1070 = vmatprep.subr.bf16.mxu0 0
        %1071 = vmatpush1.bf16.msra.mxu0 0
        %1072 = vmatprep.subr.bf16.mxu0 0
        %1073 = vmatpush1.bf16.msra.mxu0 0
        %1074 = vmatprep.subr.bf16.mxu0 0
        %1075 = vmatpush1.bf16.msra.mxu0 0
        %1076 = vmatprep.subr.bf16.mxu0 0
        %1077 = vmatpush1.bf16.msra.mxu0 0
        %1078 = vmatprep.subr.bf16.mxu0 0
        %1079 = vmatpush1.bf16.msra.mxu0 %v1059
        %1080 = vmatprep.subr.bf16.mxu0 0
        %1081 = vmatpush1.bf16.msra.mxu0 %v1058
        %1082 = vmatprep.subr.bf16.mxu0 0
        %1083 = vmatpush1.bf16.msra.mxu0 %v1057
        %1084 = vmatprep.subr.bf16.mxu0 0
        %1085 = vmatpush1.bf16.msra.mxu0 %v1056
        %1086 = vmatprep.subr.bf16.mxu0 0
        %1087 = vmatpush2.bf16.msra.mxu0 0
        %1088 = vmatprep.subr.bf16.mxu0 0
        %1089 = vmatpush2.bf16.msra.mxu0 0
        %1090 = vmatprep.subr.bf16.mxu0 0
        %1091 = vmatpush2.bf16.msra.mxu0 0
        %1092 = vmatprep.subr.bf16.mxu0 0
        %1093 = vmatpush2.bf16.msra.mxu0 0
        %1094 = vmatprep.subr.bf16.mxu0 0
        %1095 = vmatpush2.bf16.msra.mxu0 0
        %1096 = vmatprep.subr.bf16.mxu0 0
        %1097 = vmatpush2.bf16.msra.mxu0 0
        %1098 = vmatprep.subr.bf16.mxu0 0
        %1099 = vmatpush2.bf16.msra.mxu0 0
        %1100 = vmatprep.subr.bf16.mxu0 0
        %1101 = vmatpush2.bf16.msra.mxu0 0
        %1102 = vmatprep.mubr.bf16.mxu0 0
        %1103 = vmatmul.mubr.bf16.gmra.mxu0 %v1065
        %v1104 = vpop.f32.mrf.mxu0
        %v1105 = vadd.f32 %v1038, %v1104
        %v1106 = vpop.f32.mrf.mxu0
        %v1107 = vpop.f32.mrf.mxu0
        %v1108 = vadd.f32 %v1038, %v1107
        %v1109 = vpop.f32.mrf.mxu0
        %1110 = vmatprep.mubr.bf16.mxu0 0
        %1111 = vmatmul.mubr.bf16.gmra.mxu0 %v1068
        %v1112 = vpop.f32.mrf.mxu0
        %v1113 = vadd.f32 %v1038, %v1112
        %v1114 = vpop.f32.mrf.mxu0
        %v1115 = vpop.f32.mrf.mxu0
        %v1116 = vadd.f32 %v1038, %v1115
        %v1117 = vpop.f32.mrf.mxu0
        %1118 = vdwg.mxu0
        %v1119 = vsel %vm789, %v1105, 0.0
        %1120 = vadd.xlane.f32.xlu0 %v1119
        %v1121 = vpop.xlane.xlu0 %1120
        %v1122 = vsel %vm789, %v1108, 0.0
        %1123 = vadd.xlane.f32.xlu0 %v1122
        %v1124 = vpop.xlane.xlu0 %1123
        %v1125 = vsel %vm789, %v1113, 0.0
        %1126 = vadd.xlane.f32.xlu0 %v1125
        %v1127 = vpop.xlane.xlu0 %1126
        %v1128 = vsel %vm789, %v1116, 0.0
        %1129 = vadd.xlane.f32.xlu0 %v1128
        %v1130 = vpop.xlane.xlu0 %1129
        %v1131 = vrcp.pop 32.0
        %v1132 = vmul.f32 %v1121, %v1131
        %v1133 = vmul.f32 %v1124, %v1131
        %v1134 = vmul.f32 %v1127, %v1131
        %v1135 = vmul.f32 %v1130, %v1131
        %v1136 = vsub.f32 %v1105, %v1132
        %v1137 = vsub.f32 %v1108, %v1133
        %v1138 = vsub.f32 %v1113, %v1134
        %v1139 = vsub.f32 %v1116, %v1135
        %v1140 = vmul.f32 %v1136, %v1136
        %v1141 = vmul.f32 %v1137, %v1137
        %v1142 = vmul.f32 %v1138, %v1138
        %v1143 = vmul.f32 %v1139, %v1139
        %v1144 = vsel %vm789, %v1140, 0.0
        %1145 = vadd.xlane.f32.xlu0 %v1144
        %v1146 = vpop.xlane.xlu0 %1145
        %v1147 = vsel %vm789, %v1141, 0.0
        %1148 = vadd.xlane.f32.xlu0 %v1147
        %v1149 = vpop.xlane.xlu0 %1148
        %v1150 = vsel %vm789, %v1142, 0.0
        %1151 = vadd.xlane.f32.xlu0 %v1150
        %v1152 = vpop.xlane.xlu0 %1151
        %v1153 = vsel %vm789, %v1143, 0.0
        %1154 = vadd.xlane.f32.xlu0 %v1153
        %v1155 = vpop.xlane.xlu0 %1154
        %v1156 = vmul.f32 %v1146, %v1131
        %v1157 = vmul.f32 %v1149, %v1131
        %v1158 = vmul.f32 %v1152, %v1131
        %v1159 = vmul.f32 %v1155, %v1131
        %v1160 = vadd.f32 %v1156, 1e-05
        %v1161 = vadd.f32 %v1157, 1e-05
        %v1162 = vadd.f32 %v1158, 1e-05
        %v1163 = vadd.f32 %v1159, 1e-05
        %v1164 = vrsqrt.pop %v1160
        %v1165 = vrsqrt.pop %v1161
        %v1166 = vrsqrt.pop %v1162
        %v1167 = vrsqrt.pop %v1163
        %v1168 = vmul.f32 %v1136, %v1164
        %v1169 = vmul.f32 %v1137, %v1165
        %v1170 = vmul.f32 %v1138, %v1166
        %v1171 = vmul.f32 %v1139, %v1167
        %v1172 = vld [vmem:[%s10] sm:$0x1]
        %v1174 = vlaneseq
        %v1175 = vshrl.u32 %v1174, 7
        %v1176 = vsub.s32 0, %v1175
        %v1177 = vrot.slane %v1172, %v1176
        %v1179 = vmul.f32 %v1168, %v1177
        %v1180 = vmul.f32 %v1169, %v1177
        %v1181 = vmul.f32 %v1170, %v1177
        %v1182 = vmul.f32 %v1171, %v1177
        %v1183 = vld [vmem:[%s11] sm:$0x1]
        %v1185 = vlaneseq
        %v1186 = vshrl.u32 %v1185, 7
        %v1187 = vsub.s32 0, %v1186
        %v1188 = vrot.slane %v1183, %v1187
        %v1190 = vadd.f32 %v1179, %v1188
        %v1191 = vadd.f32 %v1180, %v1188
        %v1192 = vadd.f32 %v1181, %v1188
        %v1193 = vadd.f32 %v1182, %v1188
        %v1194 = vadd.f32 %v896, %v1190
        %v1195 = vadd.f32 %v897, %v1191
        %v1196 = vadd.f32 %v898, %v1192
        %v1197 = vadd.f32 %v899, %v1193
        %v1198 = vpack.c.bf16 %v1195, %v1194
        %v1199 = vpack.c.bf16 %v1197, %v1196
        %v1200 = vld [vmem:[%s12] sm:$0xf]
        %v1201 = vld [vmem:[%s12 + $0x4] sm:$0xf]
        %v1202 = vld [vmem:[%s12 + $0x8] sm:$0xf]
        %v1203 = vld [vmem:[%s12 + $0xc] sm:$0xf]
        %v1204 = vld [vmem:[%s13] sm:$0x1]
        %v1206 = vlaneseq
        %v1207 = vshrl.u32 %v1206, 7
        %v1208 = vsub.s32 0, %v1207
        %v1209 = vrot.slane %v1204, %v1208
        %v1215 = vunpack.c.l.b16 %v1200
        %v1216 = vunpack.c.l.b16 %v1201
        %v1217 = vunpack.c.l.b16 %v1202
        %v1218 = vunpack.c.l.b16 %v1203
        %v1219 = vpack.c.b16 %v1216, %v1215
        %v1220 = vpack.c.b16 %v1218, %v1217
        %v1224 = vsel %vm789, %v1198, 0
        %v1227 = vsel %vm789, %v1199, 0
        %1229 = vmatprep.subr.bf16.mxu0 0
        %1230 = vmatpush1.bf16.msra.mxu0 0
        %1231 = vmatprep.subr.bf16.mxu0 0
        %1232 = vmatpush1.bf16.msra.mxu0 0
        %1233 = vmatprep.subr.bf16.mxu0 0
        %1234 = vmatpush1.bf16.msra.mxu0 0
        %1235 = vmatprep.subr.bf16.mxu0 0
        %1236 = vmatpush1.bf16.msra.mxu0 0
        %1237 = vmatprep.subr.bf16.mxu0 0
        %1238 = vmatpush1.bf16.msra.mxu0 0
        %1239 = vmatprep.subr.bf16.mxu0 0
        %1240 = vmatpush1.bf16.msra.mxu0 0
        %1241 = vmatprep.subr.bf16.mxu0 0
        %1242 = vmatpush1.bf16.msra.mxu0 %v1220
        %1243 = vmatprep.subr.bf16.mxu0 0
        %1244 = vmatpush1.bf16.msra.mxu0 %v1219
        %1245 = vmatprep.subr.bf16.mxu0 0
        %1246 = vmatpush2.bf16.msra.mxu0 0
        %1247 = vmatprep.subr.bf16.mxu0 0
        %1248 = vmatpush2.bf16.msra.mxu0 0
        %1249 = vmatprep.subr.bf16.mxu0 0
        %1250 = vmatpush2.bf16.msra.mxu0 0
        %1251 = vmatprep.subr.bf16.mxu0 0
        %1252 = vmatpush2.bf16.msra.mxu0 0
        %1253 = vmatprep.subr.bf16.mxu0 0
        %1254 = vmatpush2.bf16.msra.mxu0 0
        %1255 = vmatprep.subr.bf16.mxu0 0
        %1256 = vmatpush2.bf16.msra.mxu0 0
        %1257 = vmatprep.subr.bf16.mxu0 0
        %1258 = vmatpush2.bf16.msra.mxu0 0
        %1259 = vmatprep.subr.bf16.mxu0 0
        %1260 = vmatpush2.bf16.msra.mxu0 0
        %1261 = vmatprep.mubr.bf16.mxu0 0
        %1262 = vmatmul.mubr.bf16.gmra.mxu0 %v1224
        %v1263 = vpop.f32.mrf.mxu0
        %v1264 = vadd.f32 %v1209, %v1263
        %v1265 = vpop.f32.mrf.mxu0
        %v1266 = vpop.f32.mrf.mxu0
        %v1267 = vadd.f32 %v1209, %v1266
        %v1268 = vpop.f32.mrf.mxu0
        %1269 = vmatprep.mubr.bf16.mxu0 0
        %1270 = vmatmul.mubr.bf16.gmra.mxu0 %v1227
        %v1271 = vpop.f32.mrf.mxu0
        %v1272 = vadd.f32 %v1209, %v1271
        %v1273 = vpop.f32.mrf.mxu0
        %v1274 = vpop.f32.mrf.mxu0
        %v1275 = vadd.f32 %v1209, %v1274
        %v1276 = vpop.f32.mrf.mxu0
        %1277 = vdwg.mxu0
        %v1278 = vpack.c.bf16 %v1267, %v1264
        %v1279 = vpack.c.bf16 %v1275, %v1272
        %v1282 = vunpack.c.l.b16 %v1278
        %v1283 = vunpack.c.h.b16 %v1278
        %v1284 = vunpack.c.l.b16 %v1279
        %v1285 = vunpack.c.h.b16 %v1279
        %v1286 = vpack.c.b16 %v1282, %v1282
        %v1287 = vpack.c.b16 %v1283, %v1283
        %v1288 = vpack.c.b16 %v1284, %v1284
        %v1289 = vpack.c.b16 %v1285, %v1285
        %vm1294 = vcmask 519168
        %1295 = vst.msk [vmem:[%s593] sm:$0xf] %vm1294, %v1286
        %1296 = vst.msk [vmem:[%s593 + $0x4] sm:$0xf] %vm1294, %v1287
        %1297 = vst.msk [vmem:[%s593 + $0x8] sm:$0xf] %vm1294, %v1288
        %1298 = vst.msk [vmem:[%s593 + $0xc] sm:$0xf] %vm1294, %v1289
        %s1299 = sand.u32 %s337, 1
        %s1300 = sand.u32 %s337, 1
        %s1301 = smul.addr %s1300, 16
        %s1302 = scalar_lea.vmem [#allocation4], %s1301
        // Predicated region
        $region159: #{_lambda_.1} parent=149 // pred_check
          %p1303 = pneg %p347
        $region160: #{_lambda_.1} parent=149 // pred_check_branch
          %1305 = sbr.rel (%p1303) target = $region162
        $region161: #{_lambda_.1} parent=149 // pred_region
          %s1306 = smul.u32 2, %s25
          %s1307 = smul.addr %s1306, 4
          %s1308 = scalar_lea.vmem %s14, %s1307
          // Predicated region
          $region163: #{_lambda_.1} parent=161 // pred_check
            _
          $region164: #{_lambda_.1} parent=161 // pred_check_branch
            %1310 = sbr.rel (0) target = $region166
          $region165: #{_lambda_.1} parent=161 // pred_region
            // Predicated region
            $region167: #{_lambda_.1} parent=165 // pred_check
              _
            $region168: #{_lambda_.1} parent=165 // pred_check_branch
              %1312 = sbr.rel target = $region170
            $region169: #{_lambda_.1} parent=165 // pred_region
              // Predicated region
              $region182: #{_lambda_.1} parent=169 // pred_check
                _
              $region183: #{_lambda_.1} parent=169 // pred_check_branch
                %1334 = sbr.rel (0) target = $region185
              $region184: #{_lambda_.1} parent=169 // pred_region
                loop: start=0, step=1, limit=1
                $region186: #{_lambda_.1} parent=184 // loop_pre_header
                  _
                $region187: #{_lambda_.1} parent=184 // loop_header
                  %s1336 = sphi 0, %s1340
                  %p1337 = scmp.ge.s32.totalorder %s1336, 1
                  %s1341 = sphi %s1302, %s1302
                  %s1342 = sphi %s1308, %s1308
                $region188: #{_lambda_.1} parent=184 // loop_header_branch
                  %1339 = sbr.rel (%p1337) target = $region192
                $region189: #{_lambda_.1} parent=184 // loop_body
                  _
                $region190: #{_lambda_.1} parent=184 // loop_footer
                  %s1340 = sadd.s32 1, %s1336
                $region191: #{_lambda_.1} parent=184 // loop_footer_branch
                  %1335 = sbr.rel target = $region187
                $region192: #{_lambda_.1} parent=184 // loop_exit
                  _
                %s1344 = ssub.s32 16, 1
                loop: start=0, step=1, limit=1
                $region193: #{_lambda_.1} parent=184 // loop_pre_header
                  _
                $region194: #{_lambda_.1} parent=184 // loop_header
                  %s1346 = sphi 0, %s1350
                  %p1347 = scmp.ge.s32.totalorder %s1346, 1
                  %s1351 = sphi %s1302, %s1302
                  %s1352 = sphi %s1308, %s1308
                $region195: #{_lambda_.1} parent=184 // loop_header_branch
                  %1349 = sbr.rel (%p1347) target = $region199
                $region196: #{_lambda_.1} parent=184 // loop_body
                  %v1353 = vld [vmem:[%s1351] sm:%s1344]
                  %1354 = vst [vmem:[%s1352] sm:%s1344] %v1353
                  %v1355 = vld [vmem:[%s1351 + $0x4] sm:%s1344]
                  %1356 = vst [vmem:[%s1352 + $0x4] sm:%s1344] %v1355
                  %v1357 = vld [vmem:[%s1351 + $0x8] sm:%s1344]
                  %1358 = vst [vmem:[%s1352 + $0x28] sm:%s1344] %v1357
                  %v1359 = vld [vmem:[%s1351 + $0xc] sm:%s1344]
                  %1360 = vst [vmem:[%s1352 + $0x2c] sm:%s1344] %v1359
                $region197: #{_lambda_.1} parent=184 // loop_footer
                  %s1350 = sadd.s32 1, %s1346
                $region198: #{_lambda_.1} parent=184 // loop_footer_branch
                  %1345 = sbr.rel target = $region194
                $region199: #{_lambda_.1} parent=184 // loop_exit
                  _
              $region185: #{_lambda_.1} parent=169 // pred_fallthru
                _
            $region170: #{_lambda_.1} parent=165 // pred_fallthru
              _
            // Predicated region
            $region171: #{_lambda_.1} parent=165 // pred_check
              _
            $region172: #{_lambda_.1} parent=165 // pred_check_branch
              %1314 = sbr.rel (0) target = $region174
            $region173: #{_lambda_.1} parent=165 // pred_region
              %s1316 = ssub.s32 16, 1
              loop: start=0, step=1, limit=1
              $region175: #{_lambda_.1} parent=173 // loop_pre_header
                _
              $region176: #{_lambda_.1} parent=173 // loop_header
                %s1318 = sphi 0, %s1322
                %p1319 = scmp.ge.s32.totalorder %s1318, 1
                %s1323 = sphi %s1302, %s1302
                %s1324 = sphi %s1308, %s1308
              $region177: #{_lambda_.1} parent=173 // loop_header_branch
                %1321 = sbr.rel (%p1319) target = $region181
              $region178: #{_lambda_.1} parent=173 // loop_body
                %v1325 = vld [vmem:[%s1323] sm:%s1316]
                %1326 = vst [vmem:[%s1324] sm:%s1316] %v1325
                %v1327 = vld [vmem:[%s1323 + $0x4] sm:%s1316]
                %1328 = vst [vmem:[%s1324 + $0x4] sm:%s1316] %v1327
                %v1329 = vld [vmem:[%s1323 + $0x8] sm:%s1316]
                %1330 = vst [vmem:[%s1324 + $0x28] sm:%s1316] %v1329
                %v1331 = vld [vmem:[%s1323 + $0xc] sm:%s1316]
                %1332 = vst [vmem:[%s1324 + $0x2c] sm:%s1316] %v1331
              $region179: #{_lambda_.1} parent=173 // loop_footer
                %s1322 = sadd.s32 1, %s1318
              $region180: #{_lambda_.1} parent=173 // loop_footer_branch
                %1317 = sbr.rel target = $region176
              $region181: #{_lambda_.1} parent=173 // loop_exit
                _
            $region174: #{_lambda_.1} parent=165 // pred_fallthru
              _
          $region166: #{_lambda_.1} parent=161 // pred_fallthru
            _
          %1361 = vnop
        $region162: #{_lambda_.1} parent=149 // pred_fallthru
          _
      $region150: #{_lambda_.1} parent=5 // pred_fallthru
        _
      %p1362 = scmp.le.s32.totalorder 2, %s20
      // Predicated region
      $region200: #{_lambda_.1} parent=5 // pred_check
        %p1363 = pneg %p1362
      $region201: #{_lambda_.1} parent=5 // pred_check_branch
        %1365 = sbr.rel (%p1363) target = $region203
      $region202: #{_lambda_.1} parent=5 // pred_region
        %s1366 = ssub.s32 %s20, 2
        // Predicated region
        $region204: #{_lambda_.1} parent=202 // pred_check
          %p1367 = pneg %p353
        $region205: #{_lambda_.1} parent=202 // pred_check_branch
          %1369 = sbr.rel (%p1367) target = $region207
        $region206: #{_lambda_.1} parent=202 // pred_region
          %s1370 = sand.u32 %s338, 1
          %s1371 = sand.u32 %s338, 1
          %s1372 = smul.addr %s1371, 16
          %s1373 = scalar_lea.vmem [#allocation4], %s1372
        $region207: #{_lambda_.1} parent=202 // pred_fallthru
          _
      $region203: #{_lambda_.1} parent=5 // pred_fallthru
        _
    $region6: #{_lambda_.1} parent=1 // loop_footer
      %s24 = sadd.s32 1, %s20
    $region7: #{_lambda_.1} parent=1 // loop_footer_branch
      %19 = sbr.rel target = $region3
    $region8: #{_lambda_.1} parent=1 // loop_exit
      _

</llo_original>
